<compile_context>
chip_gen: v6e
topology: v6e:2x2x1
jax: 0.10.0
libtpu: 0.0.40
codegen_flags: <defaults>
</compile_context>

<pallas_src>
import functools

import jax
import jax.numpy as jnp
import numpy as np
from jax import lax
from jax.experimental import pallas as pl
from jax.experimental.pallas import tpu as pltpu


# ----------------------------------------------------------------------------
# Pallas kernel: fused (tap-decomposed deconv matmul) + inverse GDN + activation
# ----------------------------------------------------------------------------
def _deconv_block_kernel(x_ref, w_ref, g_ref, b_ref, a_ref, o_ref, *, K, Wp, L_pad, act):
    """x_ref: (1, Cin, L_in)   bf16 flattened zero-padded input (lane axis = flat spatial)
       w_ref: (K*K, Cout, Cin) bf16 direct-conv weight, one (Cout, Cin) slab per tap
       g_ref: (Cout, Cout)     f32 GDN gamma, (out_ch, in_ch) layout
       b_ref: (Cout, 1)        f32 GDN beta
       a_ref: (1,) in SMEM     f32 PReLU slope
       o_ref: (1, Cout, L_pad) f32 lane-dense flattened output tile
    """
    xv = x_ref[0]                                      # (Cin, L_in) bf16, loaded once

    # Transposed conv == direct conv on the padded/dilated input.  With rows kept at the
    # padded width Wp, tap (dy, dx) is a constant lane shift of dy*Wp + dx, so the conv
    # is just K*K shifted-slice matmuls accumulated in f32 (no im2col, no transposes).
    conv = None
    for dy in range(K):
        for dx in range(K):
            shift = dy * Wp + dx
            piece = jnp.dot(w_ref[dy * K + dx], xv[:, shift:shift + L_pad],
                            preferred_element_type=jnp.float32)       # (Cout, L_pad) f32
            conv = piece if conv is None else conv + piece

    # inverse GDN:  y_c = x_c * sqrt(beta_c + sum_j gamma[c, j] * x_j^2)   (all f32)
    norm_sq = jnp.dot(g_ref[...], conv * conv,
                      preferred_element_type=jnp.float32) + b_ref[...]
    out = conv * jnp.sqrt(jnp.maximum(norm_sq, 0.0))   # clamp: robust if norm_sq < 0

    if act == "prelu":
        a = a_ref[0]                                   # scalar read from SMEM
        out = jnp.where(out >= 0.0, out, a * out)
    else:  # sigmoid via tanh -> EUP slot, no VALU divide
        out = 0.5 * (jnp.tanh(0.5 * out) + 1.0)

    o_ref[0] = out.astype(o_ref.dtype)


# ----------------------------------------------------------------------------
# Wrapper: one deconv_block (ConvTranspose2d + IGDN + activation), NCHW in / NCHW out
# ----------------------------------------------------------------------------
def deconv_block_pallas(x, w_t, gamma, beta, alpha, *, stride=1, padding=1,
                        output_padding=0, act="prelu"):
    """x:     (N, Cin, H, W) float32, NCHW (PyTorch convention)
       w_t:   ConvTranspose2d weight (Cin, Cout, K, K), no bias
       gamma: (Cout, Cout) GDN gamma in (out_ch, in_ch) layout
       beta:  (Cout,) GDN beta
       alpha: (1,) PReLU slope
       returns (N, Cout, Hout, Wout) float32, NCHW
    """
    N, Cin, H, W = x.shape
    Cout, K = w_t.shape[1], w_t.shape[2]
    assert K - 1 - padding >= 0, "padding > kernel_size - 1 not supported"
    Hout = (H - 1) * stride - 2 * padding + K + output_padding
    Wout = (W - 1) * stride - 2 * padding + K + output_padding

    # ConvTranspose2d == correlation of the zero-dilated / zero-padded input with the
    # spatially flipped kernel (in/out channel roles swapped).
    # TODO(synk): for stride > 1 use the sub-pixel phase decomposition instead of
    # zero-dilation (skips ~stride^2 x structurally-zero input bytes / MXU flops).
    lead = K - 1 - padding
    trail = K - 1 - padding + output_padding
    xp = lax.pad(x.astype(jnp.float32), 0.0,
                 [(0, 0, 0), (0, 0, 0),
                  (lead, trail, stride - 1), (lead, trail, stride - 1)])
    Hp, Wp = xp.shape[2], xp.shape[3]          # Hp = Hout + K - 1, Wp = Wout + K - 1

    # Flattened-spatial formulation: the kernel computes Wp-wide output rows (the K-1
    # junk columns per row are sliced away below).  L_pad is rounded up to a multiple of
    # 128 so the output stores are unmasked; the extra lanes read zero padding.
    L_out = Hout * Wp                                   # valid flattened output length
    L_pad = ((L_out + 127) // 128) * 128                # lane-dense stores
    L_in = L_pad + (K - 1) * Wp + (K - 1)               # covers every tap slice in-bounds
    x_flat = xp.reshape(N, Cin, Hp * Wp)
    x_flat = jnp.pad(x_flat, ((0, 0), (0, 0), (0, L_in - Hp * Wp)))
    x_bf16 = x_flat.astype(jnp.bfloat16)                # bf16 MXU operand (f32 accum)

    # Direct-conv weight per tap: w_taps[dy*K + dx, c_out, c_in]  (bf16 MXU operand).
    w_taps = (jnp.flip(w_t, axis=(2, 3)).transpose(2, 3, 1, 0)
              .reshape(K * K, Cout, Cin).astype(jnp.bfloat16))

    gamma_f = jnp.asarray(gamma, jnp.float32)
    beta_c = jnp.asarray(beta, jnp.float32).reshape(Cout, 1)
    alpha_s = jnp.asarray(alpha, jnp.float32).reshape(1)

    # VMEM budget: double-buffered in/out blocks + weights + f32 working set.
    vmem_est = (2 * (Cin * L_in * 2 + Cout * L_pad * 4)
                + K * K * Cout * Cin * 2 + Cout * Cout * 4 + Cout * 4
                + 4 * Cout * L_pad * 4)
    vmem_limit = int(min(64 << 20, max(32 << 20, 2 * vmem_est)))
    # TODO(synk): if vmem_est grows to tens of MiB (very large feature maps), switch to
    # halo'd row tiles with manual double-buffered DMA instead of one full-image block.

    kern = functools.partial(_deconv_block_kernel, K=K, Wp=Wp, L_pad=L_pad, act=act)
    out_flat = pl.pallas_call(
        kern,
        out_shape=jax.ShapeDtypeStruct((N, Cout, L_pad), jnp.float32),
        grid_spec=pltpu.PrefetchScalarGridSpec(
            num_scalar_prefetch=0,
            grid=(N,),                                   # >= 2 parallel points for v7x
            in_specs=[
                pl.BlockSpec((1, Cin, L_in), lambda n: (n, 0, 0)),
                pl.BlockSpec((K * K, Cout, Cin), lambda n: (0, 0, 0)),
                pl.BlockSpec((Cout, Cout), lambda n: (0, 0)),
                pl.BlockSpec((Cout, 1), lambda n: (0, 0)),
                pl.BlockSpec(memory_space=pltpu.MemorySpace.SMEM),
            ],
            out_specs=pl.BlockSpec((1, Cout, L_pad), lambda n: (n, 0, 0)),
        ),
        compiler_params=pltpu.CompilerParams(
            dimension_semantics=("parallel",),
            vmem_limit_bytes=vmem_limit),
    )(x_bf16, w_taps, gamma_f, beta_c, alpha_s)

    # Trim junk columns / padding and go back to NCHW with slice + reshape (no transpose).
    out = out_flat[:, :, :L_out].reshape(N, Cout, Hout, Wp)[:, :, :, :Wout]
    return out


# ----------------------------------------------------------------------------
# Pure-JAX reference (lax conv, HIGHEST precision) for the correctness check.
# The conv operands are quantized to bf16 exactly like the kernel's MXU operands
# (accumulation stays f32), so the comparison isolates kernel correctness.
# ----------------------------------------------------------------------------
def deconv_block_reference(x, w_t, gamma, beta, alpha, *, stride, padding,
                           output_padding, act):
    xq = x.astype(jnp.bfloat16).astype(jnp.float32)
    wq = jnp.asarray(w_t).astype(jnp.bfloat16).astype(jnp.float32)
    K = w_t.shape[2]
    lead = K - 1 - padding
    trail = lead + output_padding
    w_hwio = jnp.flip(wq, axis=(2, 3)).transpose(2, 3, 0, 1)            # (K,K,Cin,Cout)
    y = lax.conv_general_dilated(
        xq, w_hwio, window_strides=(1, 1),
        padding=[(lead, trail), (lead, trail)],
        lhs_dilation=(stride, stride),
        dimension_numbers=("NCHW", "HWIO", "NCHW"),
        precision=lax.Precision.HIGHEST)
    g = jnp.asarray(gamma, jnp.float32)
    norm = jnp.sqrt(jnp.einsum("nchw,dc->ndhw", y * y, g,
                               precision=lax.Precision.HIGHEST)
                    + jnp.asarray(beta, jnp.float32).reshape(1, -1, 1, 1))
    z = y * norm
    if act == "prelu":
        return jnp.where(z >= 0, z, jnp.asarray(alpha).reshape(()) * z)
    return jax.nn.sigmoid(z)


# ----------------------------------------------------------------------------
if __name__ == "__main__":
    key = jax.random.PRNGKey(0)
    k1, k2, k3, k4 = jax.random.split(key, 4)

    # --- config 1: default deconv_block (stride=1, padding=1) with PReLU -----------
    batch, Cin, H, W = 2, 16, 16, 16
    Cout, K = 32, 3
    x = jax.random.normal(k1, (batch, Cin, H, W), jnp.float32)
    bound = 1.0 / np.sqrt(Cout * K * K)                      # PyTorch ConvTranspose2d init
    w = jax.random.uniform(k2, (Cin, Cout, K, K), jnp.float32, -bound, bound)
    gamma = 0.1 * jnp.eye(Cout, dtype=jnp.float32)           # GDN default init
    beta = jnp.ones((Cout,), jnp.float32)
    alpha = jnp.full((1,), 0.25, jnp.float32)                # nn.PReLU() default

    fwd = jax.jit(functools.partial(deconv_block_pallas, stride=1, padding=1,
                                    output_padding=0, act="prelu"))
    out = jax.block_until_ready(fwd(x, w, gamma, beta, alpha))
    assert out.shape == (batch, Cout, H, W), out.shape
    ref = deconv_block_reference(x, w, gamma, beta, alpha, stride=1, padding=1,
                                 output_padding=0, act="prelu")
    np.testing.assert_allclose(np.asarray(out), np.asarray(ref), rtol=2e-3, atol=2e-3)

    # --- config 2: strided upsampling block with Sigmoid (exercises both branches) --
    Cin2, Cout2 = Cout, 3
    x2 = jax.random.normal(k3, (batch, Cin2, H, W), jnp.float32)
    bound2 = 1.0 / np.sqrt(Cout2 * K * K)
    w2 = jax.random.uniform(k4, (Cin2, Cout2, K, K), jnp.float32, -bound2, bound2)
    gamma2 = 0.1 * jnp.eye(Cout2, dtype=jnp.float32)
    beta2 = jnp.ones((Cout2,), jnp.float32)

    fwd2 = jax.jit(functools.partial(deconv_block_pallas, stride=2, padding=1,
                                     output_padding=1, act="sigmoid"))
    out2 = jax.block_until_ready(fwd2(x2, w2, gamma2, beta2, alpha))
    assert out2.shape == (batch, Cout2, 2 * H, 2 * W), out2.shape
    ref2 = deconv_block_reference(x2, w2, gamma2, beta2, alpha, stride=2, padding=1,
                                  output_padding=1, act="sigmoid")
    np.testing.assert_allclose(np.asarray(out2), np.asarray(ref2), rtol=2e-3, atol=2e-3)

    print("KERNEL_OK")
</pallas_src>

<mosaic_0001>
module attributes {stable_mosaic.version = 11 : i64} {
  func.func @_deconv_block_kernel(%arg0: i32, %arg1: memref<1x16x422xbf16, #tpu.memory_space<vmem>>, %arg2: memref<9x32x16xbf16, #tpu.memory_space<vmem>>, %arg3: memref<32x32xf32, #tpu.memory_space<vmem>>, %arg4: memref<32x1xf32, #tpu.memory_space<vmem>>, %arg5: memref<1xf32, #tpu.memory_space<smem>>, %arg6: memref<1x32x384xf32, #tpu.memory_space<vmem>>) attributes {dimension_semantics = [#tpu.dimension_semantics<parallel>], iteration_bounds = array<i64: 2>, scalar_prefetch = 0 : i64, scratch_operands = 0 : i64, tpu.core_type = #tpu.core_type<tc>, window_params = [{transform_indices = @transform_0, window_bounds = array<i64: 1, 16, 422>}, {pipeline_mode = #tpu.pipeline_mode<synchronous>, transform_indices = @transform_1, window_bounds = array<i64: 9, 32, 16>}, {pipeline_mode = #tpu.pipeline_mode<synchronous>, transform_indices = @transform_2, window_bounds = array<i64: 32, 32>}, {pipeline_mode = #tpu.pipeline_mode<synchronous>, transform_indices = @transform_3, window_bounds = array<i64: 32, 1>}, {transform_indices = @transform_4, window_bounds = array<i64: 1>}, {transform_indices = @transform_5, window_bounds = array<i64: 1, 32, 384>}]} {
    %c0 = arith.constant 0 : index
    %c0_0 = arith.constant 0 : index
    %c0_1 = arith.constant 0 : index
    %0 = vector.load %arg1[%c0, %c0_0, %c0_1] : memref<1x16x422xbf16, #tpu.memory_space<vmem>>, vector<1x16x422xbf16>
    %1 = vector.shape_cast %0 : vector<1x16x422xbf16> to vector<16x422xbf16>
    %c0_2 = arith.constant 0 : index
    %c0_3 = arith.constant 0 : index
    %c0_4 = arith.constant 0 : index
    %2 = vector.load %arg2[%c0_2, %c0_3, %c0_4] : memref<9x32x16xbf16, #tpu.memory_space<vmem>>, vector<1x32x16xbf16>
    %3 = vector.shape_cast %2 : vector<1x32x16xbf16> to vector<32x16xbf16>
    %4 = vector.extract_strided_slice %1 {offsets = [0, 0], sizes = [16, 384], strides = [1, 1]} : vector<16x422xbf16> to vector<16x384xbf16>
    %cst = arith.constant dense<0.000000e+00> : vector<32x384xf32>
    %5 = tpu.matmul %3, %4, %cst {dimension_numbers = #tpu.dot_dimension_numbers<[1], [0], [0], [1], [0, 0, 1, 1], [], []>} : vector<32x16xbf16>, vector<16x384xbf16>, vector<32x384xf32> -> vector<32x384xf32>
    %c1 = arith.constant 1 : index
    %c0_5 = arith.constant 0 : index
    %c0_6 = arith.constant 0 : index
    %6 = vector.load %arg2[%c1, %c0_5, %c0_6] : memref<9x32x16xbf16, #tpu.memory_space<vmem>>, vector<1x32x16xbf16>
    %7 = vector.shape_cast %6 : vector<1x32x16xbf16> to vector<32x16xbf16>
    %8 = vector.extract_strided_slice %1 {offsets = [0, 1], sizes = [16, 384], strides = [1, 1]} : vector<16x422xbf16> to vector<16x384xbf16>
    %cst_7 = arith.constant dense<0.000000e+00> : vector<32x384xf32>
    %9 = tpu.matmul %7, %8, %cst_7 {dimension_numbers = #tpu.dot_dimension_numbers<[1], [0], [0], [1], [0, 0, 1, 1], [], []>} : vector<32x16xbf16>, vector<16x384xbf16>, vector<32x384xf32> -> vector<32x384xf32>
    %10 = arith.addf %5, %9 : vector<32x384xf32>
    %c2 = arith.constant 2 : index
    %c0_8 = arith.constant 0 : index
    %c0_9 = arith.constant 0 : index
    %11 = vector.load %arg2[%c2, %c0_8, %c0_9] : memref<9x32x16xbf16, #tpu.memory_space<vmem>>, vector<1x32x16xbf16>
    %12 = vector.shape_cast %11 : vector<1x32x16xbf16> to vector<32x16xbf16>
    %13 = vector.extract_strided_slice %1 {offsets = [0, 2], sizes = [16, 384], strides = [1, 1]} : vector<16x422xbf16> to vector<16x384xbf16>
    %cst_10 = arith.constant dense<0.000000e+00> : vector<32x384xf32>
    %14 = tpu.matmul %12, %13, %cst_10 {dimension_numbers = #tpu.dot_dimension_numbers<[1], [0], [0], [1], [0, 0, 1, 1], [], []>} : vector<32x16xbf16>, vector<16x384xbf16>, vector<32x384xf32> -> vector<32x384xf32>
    %15 = arith.addf %10, %14 : vector<32x384xf32>
    %c3 = arith.constant 3 : index
    %c0_11 = arith.constant 0 : index
    %c0_12 = arith.constant 0 : index
    %16 = vector.load %arg2[%c3, %c0_11, %c0_12] : memref<9x32x16xbf16, #tpu.memory_space<vmem>>, vector<1x32x16xbf16>
    %17 = vector.shape_cast %16 : vector<1x32x16xbf16> to vector<32x16xbf16>
    %18 = vector.extract_strided_slice %1 {offsets = [0, 18], sizes = [16, 384], strides = [1, 1]} : vector<16x422xbf16> to vector<16x384xbf16>
    %cst_13 = arith.constant dense<0.000000e+00> : vector<32x384xf32>
    %19 = tpu.matmul %17, %18, %cst_13 {dimension_numbers = #tpu.dot_dimension_numbers<[1], [0], [0], [1], [0, 0, 1, 1], [], []>} : vector<32x16xbf16>, vector<16x384xbf16>, vector<32x384xf32> -> vector<32x384xf32>
    %20 = arith.addf %15, %19 : vector<32x384xf32>
    %c4 = arith.constant 4 : index
    %c0_14 = arith.constant 0 : index
    %c0_15 = arith.constant 0 : index
    %21 = vector.load %arg2[%c4, %c0_14, %c0_15] : memref<9x32x16xbf16, #tpu.memory_space<vmem>>, vector<1x32x16xbf16>
    %22 = vector.shape_cast %21 : vector<1x32x16xbf16> to vector<32x16xbf16>
    %23 = vector.extract_strided_slice %1 {offsets = [0, 19], sizes = [16, 384], strides = [1, 1]} : vector<16x422xbf16> to vector<16x384xbf16>
    %cst_16 = arith.constant dense<0.000000e+00> : vector<32x384xf32>
    %24 = tpu.matmul %22, %23, %cst_16 {dimension_numbers = #tpu.dot_dimension_numbers<[1], [0], [0], [1], [0, 0, 1, 1], [], []>} : vector<32x16xbf16>, vector<16x384xbf16>, vector<32x384xf32> -> vector<32x384xf32>
    %25 = arith.addf %20, %24 : vector<32x384xf32>
    %c5 = arith.constant 5 : index
    %c0_17 = arith.constant 0 : index
    %c0_18 = arith.constant 0 : index
    %26 = vector.load %arg2[%c5, %c0_17, %c0_18] : memref<9x32x16xbf16, #tpu.memory_space<vmem>>, vector<1x32x16xbf16>
    %27 = vector.shape_cast %26 : vector<1x32x16xbf16> to vector<32x16xbf16>
    %28 = vector.extract_strided_slice %1 {offsets = [0, 20], sizes = [16, 384], strides = [1, 1]} : vector<16x422xbf16> to vector<16x384xbf16>
    %cst_19 = arith.constant dense<0.000000e+00> : vector<32x384xf32>
    %29 = tpu.matmul %27, %28, %cst_19 {dimension_numbers = #tpu.dot_dimension_numbers<[1], [0], [0], [1], [0, 0, 1, 1], [], []>} : vector<32x16xbf16>, vector<16x384xbf16>, vector<32x384xf32> -> vector<32x384xf32>
    %30 = arith.addf %25, %29 : vector<32x384xf32>
    %c6 = arith.constant 6 : index
    %c0_20 = arith.constant 0 : index
    %c0_21 = arith.constant 0 : index
    %31 = vector.load %arg2[%c6, %c0_20, %c0_21] : memref<9x32x16xbf16, #tpu.memory_space<vmem>>, vector<1x32x16xbf16>
    %32 = vector.shape_cast %31 : vector<1x32x16xbf16> to vector<32x16xbf16>
    %33 = vector.extract_strided_slice %1 {offsets = [0, 36], sizes = [16, 384], strides = [1, 1]} : vector<16x422xbf16> to vector<16x384xbf16>
    %cst_22 = arith.constant dense<0.000000e+00> : vector<32x384xf32>
    %34 = tpu.matmul %32, %33, %cst_22 {dimension_numbers = #tpu.dot_dimension_numbers<[1], [0], [0], [1], [0, 0, 1, 1], [], []>} : vector<32x16xbf16>, vector<16x384xbf16>, vector<32x384xf32> -> vector<32x384xf32>
    %35 = arith.addf %30, %34 : vector<32x384xf32>
    %c7 = arith.constant 7 : index
    %c0_23 = arith.constant 0 : index
    %c0_24 = arith.constant 0 : index
    %36 = vector.load %arg2[%c7, %c0_23, %c0_24] : memref<9x32x16xbf16, #tpu.memory_space<vmem>>, vector<1x32x16xbf16>
    %37 = vector.shape_cast %36 : vector<1x32x16xbf16> to vector<32x16xbf16>
    %38 = vector.extract_strided_slice %1 {offsets = [0, 37], sizes = [16, 384], strides = [1, 1]} : vector<16x422xbf16> to vector<16x384xbf16>
    %cst_25 = arith.constant dense<0.000000e+00> : vector<32x384xf32>
    %39 = tpu.matmul %37, %38, %cst_25 {dimension_numbers = #tpu.dot_dimension_numbers<[1], [0], [0], [1], [0, 0, 1, 1], [], []>} : vector<32x16xbf16>, vector<16x384xbf16>, vector<32x384xf32> -> vector<32x384xf32>
    %40 = arith.addf %35, %39 : vector<32x384xf32>
    %c8 = arith.constant 8 : index
    %c0_26 = arith.constant 0 : index
    %c0_27 = arith.constant 0 : index
    %41 = vector.load %arg2[%c8, %c0_26, %c0_27] : memref<9x32x16xbf16, #tpu.memory_space<vmem>>, vector<1x32x16xbf16>
    %42 = vector.shape_cast %41 : vector<1x32x16xbf16> to vector<32x16xbf16>
    %43 = vector.extract_strided_slice %1 {offsets = [0, 38], sizes = [16, 384], strides = [1, 1]} : vector<16x422xbf16> to vector<16x384xbf16>
    %cst_28 = arith.constant dense<0.000000e+00> : vector<32x384xf32>
    %44 = tpu.matmul %42, %43, %cst_28 {dimension_numbers = #tpu.dot_dimension_numbers<[1], [0], [0], [1], [0, 0, 1, 1], [], []>} : vector<32x16xbf16>, vector<16x384xbf16>, vector<32x384xf32> -> vector<32x384xf32>
    %45 = arith.addf %40, %44 : vector<32x384xf32>
    %c0_29 = arith.constant 0 : index
    %c0_30 = arith.constant 0 : index
    %46 = vector.load %arg3[%c0_29, %c0_30] : memref<32x32xf32, #tpu.memory_space<vmem>>, vector<32x32xf32>
    %47 = arith.mulf %45, %45 : vector<32x384xf32>
    %cst_31 = arith.constant dense<0.000000e+00> : vector<32x384xf32>
    %48 = tpu.matmul %46, %47, %cst_31 {dimension_numbers = #tpu.dot_dimension_numbers<[1], [0], [0], [1], [0, 0, 1, 1], [], []>} : vector<32x32xf32>, vector<32x384xf32>, vector<32x384xf32> -> vector<32x384xf32>
    %c0_32 = arith.constant 0 : index
    %c0_33 = arith.constant 0 : index
    %49 = vector.load %arg4[%c0_32, %c0_33] : memref<32x1xf32, #tpu.memory_space<vmem>>, vector<32x1xf32>
    %50 = vector.broadcast %49 : vector<32x1xf32> to vector<32x384xf32>
    %51 = arith.addf %48, %50 : vector<32x384xf32>
    %cst_34 = arith.constant 0.000000e+00 : f32
    %52 = vector.broadcast %cst_34 : f32 to vector<32x384xf32>
    %53 = arith.maximumf %51, %52 : vector<32x384xf32>
    %54 = math.sqrt %53 : vector<32x384xf32>
    %55 = arith.mulf %45, %54 : vector<32x384xf32>
    %c0_35 = arith.constant 0 : index
    %56 = memref.load %arg5[%c0_35] : memref<1xf32, #tpu.memory_space<smem>>
    %cst_36 = arith.constant 0.000000e+00 : f32
    %57 = vector.broadcast %cst_36 : f32 to vector<32x384xf32>
    %58 = arith.cmpf oge, %55, %57 : vector<32x384xf32>
    %59 = vector.broadcast %56 : f32 to vector<32x384xf32>
    %60 = arith.mulf %59, %55 : vector<32x384xf32>
    %61 = arith.select %58, %55, %60 : vector<32x384xi1>, vector<32x384xf32>
    %c0_37 = arith.constant 0 : index
    %c0_38 = arith.constant 0 : index
    %c0_39 = arith.constant 0 : index
    %62 = vector.load %arg6[%c0_37, %c0_38, %c0_39] : memref<1x32x384xf32, #tpu.memory_space<vmem>>, vector<1x32x384xf32>
    %63 = vector.shape_cast %62 : vector<1x32x384xf32> to vector<32x384xf32>
    %64 = vector.shape_cast %61 : vector<32x384xf32> to vector<1x32x384xf32>
    tpu.vector_store %arg6[%c0_37, %c0_38, %c0_39], %64 {strides = array<i32>} : memref<1x32x384xf32, #tpu.memory_space<vmem>>, vector<1x32x384xf32>,
    return
  }
  func.func @transform_0(%arg0: i32) -> (i32, i32, i32) {
    %c0_i32 = arith.constant 0 : i32
    %c0_i32_0 = arith.constant 0 : i32
    %c0_i32_1 = arith.constant 0 : i32
    return %arg0, %c0_i32, %c0_i32_0 : i32, i32, i32
  }
  func.func @transform_1(%arg0: i32) -> (i32, i32, i32) {
    %c0_i32 = arith.constant 0 : i32
    %c0_i32_0 = arith.constant 0 : i32
    %c0_i32_1 = arith.constant 0 : i32
    %c0_i32_2 = arith.constant 0 : i32
    return %c0_i32, %c0_i32_0, %c0_i32_1 : i32, i32, i32
  }
  func.func @transform_2(%arg0: i32) -> (i32, i32) {
    %c0_i32 = arith.constant 0 : i32
    %c0_i32_0 = arith.constant 0 : i32
    %c0_i32_1 = arith.constant 0 : i32
    return %c0_i32, %c0_i32_0 : i32, i32
  }
  func.func @transform_3(%arg0: i32) -> (i32, i32) {
    %c0_i32 = arith.constant 0 : i32
    %c0_i32_0 = arith.constant 0 : i32
    %c0_i32_1 = arith.constant 0 : i32
    return %c0_i32, %c0_i32_0 : i32, i32
  }
  func.func @transform_4(%arg0: i32) -> i32 {
    %c0_i32 = arith.constant 0 : i32
    %c0_i32_0 = arith.constant 0 : i32
    return %c0_i32 : i32
  }
  func.func @transform_5(%arg0: i32) -> (i32, i32, i32) {
    %c0_i32 = arith.constant 0 : i32
    %c0_i32_0 = arith.constant 0 : i32
    %c0_i32_1 = arith.constant 0 : i32
    return %arg0, %c0_i32, %c0_i32_0 : i32, i32, i32
  }
}

</mosaic_0001>

<llo_original>
// kernel: deconv_block_pallas.1
$region0: #{deconv_block_pallas.1}
  #allocation0 [shape = 'u32[]', space=smem, size = 0x4, offset = 0x4, fixed_abs, tag = 'smem constant byte address 0x4 - core index']
  #allocation1 [shape = 'u32[144,128]{1,0:T(1,128)}', space=vmem, size = 0x12000, scoped, tag = 'internal scratch']
  #allocation2 [shape = 'f32[1]{0:T(128)S(6)}', space=smem, size = 0x200, scoped, tag = 'scoped memory for deconv_block_pallas.1']
  %s0 = inlined_call_operand.vmem [shape: bf16[2,16,422], index: 0, kind: input, shape index: {}]
  %s1 = inlined_call_operand.vmem [shape: bf16[9,32,16], index: 1, kind: input, shape index: {}]
  %s2 = inlined_call_operand.vmem [shape: f32[32,32], index: 2, kind: input, shape index: {}]
  %s3 = inlined_call_operand.vmem [shape: f32[32,1], index: 3, kind: input, shape index: {}]
  %s4 = inlined_call_operand.<no memory space> [shape: f32[1], index: 4, kind: input, shape index: {}]
  %s5 = inlined_call_operand.vmem [shape: f32[2,32,384], index: 5, kind: output, shape index: {}]
  %s6 = sld [smem:[#allocation0]]
  $region53: #{deconv_block_pallas.1} parent=0
    _
  %s8 = ssub.s32 1, %s6
  %s9 = scalar_select 0, %s8, %s6
  %10 = sst [smem:[#allocation2]] %s4
  loop: start=0, step=1, limit=4
  $region2: #{deconv_block_pallas.1} parent=0 // loop_pre_header
    _
  $region3: #{deconv_block_pallas.1} parent=0 // loop_header
    %s12 = sphi 0, %s16
    %p13 = scmp.ge.s32.totalorder %s12, 4
    %s22 = sphi 0, %s24
    %s25 = sphi 0, %s22
    %s26 = sphi 0, %s25
    %s42 = sphi 0, %s26
    %s46 = sphi 0, %s46
    %s48 = sphi 0, %s46
    %s49 = sphi 0, %s48
    %s63 = sphi 0, %s49
    %s67 = sphi 0, %s67
    %s69 = sphi 0, %s67
    %s70 = sphi 0, %s69
    %s84 = sphi 0, %s70
    %s88 = sphi 0, %s88
    %s90 = sphi 0, %s88
    %s91 = sphi 0, %s90
    %s105 = sphi 0, %s91
    %s109 = sphi 0, %s109
    %s111 = sphi 0, %s109
    %s112 = sphi 0, %s111
    %s126 = sphi 0, %s112
    %s132 = sphi 0, %s134
    %s135 = sphi 0, %s132
    %s136 = sphi 0, %s135
    %s152 = sphi 0, %s136
  $region4: #{deconv_block_pallas.1} parent=0 // loop_header_branch
    %15 = sbr.rel (%p13) target = $region8
  $region5: #{deconv_block_pallas.1} parent=0 // loop_body
    %s17 = ssub.s32 %s12, 1
    %s18 = ssub.s32 %s12, 2
    %s19 = sadd.s32 %s12, 1
    %s20 = ssub.s32 %s12, %s19
    %p21 = scmp.eq.s32.totalorder %s20, 0
    %s23 = sadd.s32 %s22, 1
    %s24 = scalar_select %p21, %s22, %s23
    %p27 = pneg %p21
    %p28 = scmp.eq.s32.totalorder %s12, 1
    %p29 = por %p27, %p28
    %p30 = scmp.ne.s32.totalorder %s22, %s25
    %p31 = scmp.eq.s32.totalorder %s12, 0
    %p32 = por %p30, %p31
    %p33 = scmp.ne.s32.totalorder %s22, %s25
    %p34 = scmp.eq.s32.totalorder %s17, 1
    %p35 = por %p33, %p34
    %p36 = scmp.ne.s32.totalorder %s25, %s26
    %p37 = scmp.eq.s32.totalorder %s17, 0
    %p38 = por %p36, %p37
    %p39 = scmp.ne.s32.totalorder %s25, %s26
    %p40 = scmp.eq.s32.totalorder %s18, 1
    %p41 = por %p39, %p40
    %p43 = scmp.ne.s32.totalorder %s26, %s42
    %p44 = scmp.eq.s32.totalorder %s18, 0
    %p45 = por %p43, %p44
    %s47 = sadd.s32 %s46, 1
    %p50 = scmp.eq.s32.totalorder %s12, 1
    %p51 = scmp.ne.s32.totalorder %s46, %s48
    %p52 = scmp.eq.s32.totalorder %s12, 0
    %p53 = por %p51, %p52
    %p54 = scmp.ne.s32.totalorder %s46, %s48
    %p55 = scmp.eq.s32.totalorder %s17, 1
    %p56 = por %p54, %p55
    %p57 = scmp.ne.s32.totalorder %s48, %s49
    %p58 = scmp.eq.s32.totalorder %s17, 0
    %p59 = por %p57, %p58
    %p60 = scmp.ne.s32.totalorder %s48, %s49
    %p61 = scmp.eq.s32.totalorder %s18, 1
    %p62 = por %p60, %p61
    %p64 = scmp.ne.s32.totalorder %s49, %s63
    %p65 = scmp.eq.s32.totalorder %s18, 0
    %p66 = por %p64, %p65
    %s68 = sadd.s32 %s67, 1
    %p71 = scmp.eq.s32.totalorder %s12, 1
    %p72 = scmp.ne.s32.totalorder %s67, %s69
    %p73 = scmp.eq.s32.totalorder %s12, 0
    %p74 = por %p72, %p73
    %p75 = scmp.ne.s32.totalorder %s67, %s69
    %p76 = scmp.eq.s32.totalorder %s17, 1
    %p77 = por %p75, %p76
    %p78 = scmp.ne.s32.totalorder %s69, %s70
    %p79 = scmp.eq.s32.totalorder %s17, 0
    %p80 = por %p78, %p79
    %p81 = scmp.ne.s32.totalorder %s69, %s70
    %p82 = scmp.eq.s32.totalorder %s18, 1
    %p83 = por %p81, %p82
    %p85 = scmp.ne.s32.totalorder %s70, %s84
    %p86 = scmp.eq.s32.totalorder %s18, 0
    %p87 = por %p85, %p86
    %s89 = sadd.s32 %s88, 1
    %p92 = scmp.eq.s32.totalorder %s12, 1
    %p93 = scmp.ne.s32.totalorder %s88, %s90
    %p94 = scmp.eq.s32.totalorder %s12, 0
    %p95 = por %p93, %p94
    %p96 = scmp.ne.s32.totalorder %s88, %s90
    %p97 = scmp.eq.s32.totalorder %s17, 1
    %p98 = por %p96, %p97
    %p99 = scmp.ne.s32.totalorder %s90, %s91
    %p100 = scmp.eq.s32.totalorder %s17, 0
    %p101 = por %p99, %p100
    %p102 = scmp.ne.s32.totalorder %s90, %s91
    %p103 = scmp.eq.s32.totalorder %s18, 1
    %p104 = por %p102, %p103
    %p106 = scmp.ne.s32.totalorder %s91, %s105
    %p107 = scmp.eq.s32.totalorder %s18, 0
    %p108 = por %p106, %p107
    %s110 = sadd.s32 %s109, 1
    %p113 = scmp.eq.s32.totalorder %s12, 1
    %p114 = scmp.ne.s32.totalorder %s109, %s111
    %p115 = scmp.eq.s32.totalorder %s12, 0
    %p116 = por %p114, %p115
    %p117 = scmp.ne.s32.totalorder %s109, %s111
    %p118 = scmp.eq.s32.totalorder %s17, 1
    %p119 = por %p117, %p118
    %p120 = scmp.ne.s32.totalorder %s111, %s112
    %p121 = scmp.eq.s32.totalorder %s17, 0
    %p122 = por %p120, %p121
    %p123 = scmp.ne.s32.totalorder %s111, %s112
    %p124 = scmp.eq.s32.totalorder %s18, 1
    %p125 = por %p123, %p124
    %p127 = scmp.ne.s32.totalorder %s112, %s126
    %p128 = scmp.eq.s32.totalorder %s18, 0
    %p129 = por %p127, %p128
    %s130 = ssub.s32 %s12, %s19
    %p131 = scmp.eq.s32.totalorder %s130, 0
    %s133 = sadd.s32 %s132, 1
    %s134 = scalar_select %p131, %s132, %s133
    %p137 = pneg %p131
    %p138 = scmp.eq.s32.totalorder %s12, 1
    %p139 = por %p137, %p138
    %p140 = scmp.ne.s32.totalorder %s132, %s135
    %p141 = scmp.eq.s32.totalorder %s12, 0
    %p142 = por %p140, %p141
    %p143 = scmp.ne.s32.totalorder %s132, %s135
    %p144 = scmp.eq.s32.totalorder %s17, 1
    %p145 = por %p143, %p144
    %p146 = scmp.ne.s32.totalorder %s135, %s136
    %p147 = scmp.eq.s32.totalorder %s17, 0
    %p148 = por %p146, %p147
    %p149 = scmp.ne.s32.totalorder %s135, %s136
    %p150 = scmp.eq.s32.totalorder %s18, 1
    %p151 = por %p149, %p150
    %p153 = scmp.ne.s32.totalorder %s136, %s152
    %p154 = scmp.eq.s32.totalorder %s18, 0
    %p155 = por %p153, %p154
    %p156 = scmp.le.s32.totalorder 1, %s12
    %p157 = scmp.lt.s32.totalorder %s12, 3
    %p158 = pnand %p156, %p157
    %p159 = pneg %p158
    // Predicated region
    $region9: #{deconv_block_pallas.1} parent=5 // pred_check
      _
    $region10: #{deconv_block_pallas.1} parent=5 // pred_check_branch
      %161 = sbr.rel (%p158) target = $region12
    $region11: #{deconv_block_pallas.1} parent=5 // pred_region
      %s162 = ssub.s32 %s12, 1
      // Predicated region
      $region13: #{deconv_block_pallas.1} parent=11 // pred_check
        %p163 = pneg %p59
      $region14: #{deconv_block_pallas.1} parent=11 // pred_check_branch
        %165 = sbr.rel (%p163) target = $region16
      $region15: #{deconv_block_pallas.1} parent=11 // pred_region
        _
      $region16: #{deconv_block_pallas.1} parent=11 // pred_fallthru
        _
      // Predicated region
      $region17: #{deconv_block_pallas.1} parent=11 // pred_check
        %p166 = pneg %p80
      $region18: #{deconv_block_pallas.1} parent=11 // pred_check_branch
        %168 = sbr.rel (%p166) target = $region20
      $region19: #{deconv_block_pallas.1} parent=11 // pred_region
        _
      $region20: #{deconv_block_pallas.1} parent=11 // pred_fallthru
        _
      // Predicated region
      $region21: #{deconv_block_pallas.1} parent=11 // pred_check
        %p169 = pneg %p101
      $region22: #{deconv_block_pallas.1} parent=11 // pred_check_branch
        %171 = sbr.rel (%p169) target = $region24
      $region23: #{deconv_block_pallas.1} parent=11 // pred_region
        _
      $region24: #{deconv_block_pallas.1} parent=11 // pred_fallthru
        _
      // Predicated region
      $region25: #{deconv_block_pallas.1} parent=11 // pred_check
        %p172 = pneg %p122
      $region26: #{deconv_block_pallas.1} parent=11 // pred_check_branch
        %174 = sbr.rel (%p172) target = $region28
      $region27: #{deconv_block_pallas.1} parent=11 // pred_region
        _
      $region28: #{deconv_block_pallas.1} parent=11 // pred_fallthru
        _
    $region12: #{deconv_block_pallas.1} parent=5 // pred_fallthru
      _
    %p175 = scmp.lt.s32.totalorder %s12, 2
    // Predicated region
    $region29: #{deconv_block_pallas.1} parent=5 // pred_check
      %p176 = pneg %p175
    $region30: #{deconv_block_pallas.1} parent=5 // pred_check_branch
      %178 = sbr.rel (%p176) target = $region32
    $region31: #{deconv_block_pallas.1} parent=5 // pred_region
      // Predicated region
      $region33: #{deconv_block_pallas.1} parent=31 // pred_check
        %p179 = pneg %p32
      $region34: #{deconv_block_pallas.1} parent=31 // pred_check_branch
        %181 = sbr.rel (%p179) target = $region36
      $region35: #{deconv_block_pallas.1} parent=31 // pred_region
        %p182 = scmp.lt.s32.totalorder %s12, 1
        %s183 = scalar_select %p182, %s12, 1
        %s184 = smul.addr %s183, 8
        %s185 = smul.addr %s184, 4
        %s186 = scalar_lea.vmem %s0, %s185
      $region36: #{deconv_block_pallas.1} parent=31 // pred_fallthru
        _
    $region32: #{deconv_block_pallas.1} parent=5 // pred_fallthru
      _
    %p187 = scmp.le.s32.totalorder 1, %s12
    %p188 = scmp.lt.s32.totalorder %s12, 3
    %p189 = pnand %p187, %p188
    %p190 = pneg %p189
    // Predicated region
    $region37: #{deconv_block_pallas.1} parent=5 // pred_check
      _
    $region38: #{deconv_block_pallas.1} parent=5 // pred_check_branch
      %192 = sbr.rel (%p189) target = $region40
    $region39: #{deconv_block_pallas.1} parent=5 // pred_region
      %s193 = ssub.s32 %s12, 1
      %p194 = scmp.lt.s32.totalorder %s17, 1
      %s195 = scalar_select %p194, %s17, 1
      %s196 = smul.addr %s195, 8
      %s197 = smul.addr %s196, 4
      %s198 = scalar_lea.vmem %s0, %s197
      %p199 = pneg %p38
      %p200 = pneg %p35
      %p201 = pneg %p59
      %p202 = pneg %p56
      %p203 = pneg %p80
      %p204 = pneg %p77
      %p205 = pneg %p101
      %p206 = pneg %p98
      %p207 = pneg %p122
      %p208 = pneg %p119
      %p209 = pneg %p148
      %p210 = pneg %p145
      %p211 = scmp.lt.s32.totalorder %s17, 1
      %s212 = scalar_select %p211, %s17, 1
      %s213 = smul.addr %s212, 12
      %s214 = smul.addr %s213, 8
      %s215 = scalar_lea.vmem %s5, %s214
      %p216 = scmp.lt.s32.totalorder %s17, 1
      %s217 = scalar_select %p216, %s17, 1
      %s218 = smul.addr %s217, 8
      %s219 = smul.addr %s218, 4
      %s220 = scalar_lea.vmem %s0, %s219
      %p221 = scmp.lt.s32.totalorder %s17, 1
      %s222 = scalar_select %p221, %s17, 1
      %s223 = smul.addr %s222, 12
      %s224 = smul.addr %s223, 8
      %s225 = scalar_lea.vmem %s5, %s224
      %v227 = vld [vmem:[%s220] sm:$0xff]
      %v228 = vld [vmem:[%s220 + $0x8] sm:$0xff]
      %v229 = vld [vmem:[%s220 + $0x10] sm:$0xff]
      %v230 = vld [vmem:[%s220 + $0x18] sm:$0xff]
      %v231 = vld [vmem:[%s1] sm:$0xf]
      %v232 = vld [vmem:[%s1 + $0x4] sm:$0xf]
      %v233 = vld [vmem:[%s1 + $0x8] sm:$0xf]
      %v234 = vld [vmem:[%s1 + $0xc] sm:$0xf]
      %s235 = scalar_lea.vmem %s1, 16
      %v236 = vld [vmem:[%s235] sm:$0xf]
      %v237 = vld [vmem:[%s235 + $0x4] sm:$0xf]
      %v238 = vld [vmem:[%s235 + $0x8] sm:$0xf]
      %v239 = vld [vmem:[%s235 + $0xc] sm:$0xf]
      %v244 = vunpack.c.l.b16 %v236
      %v245 = vunpack.c.l.b16 %v237
      %v246 = vunpack.c.l.b16 %v238
      %v247 = vunpack.c.l.b16 %v239
      %v248 = vpack.c.b16 %v245, %v244
      %v249 = vpack.c.b16 %v247, %v246
      %v254 = vunpack.c.l.b16 %v227
      %v255 = vunpack.c.h.b16 %v227
      %v256 = vunpack.c.l.b16 %v228
      %v257 = vunpack.c.h.b16 %v228
      %v258 = vunpack.c.l.b16 %v229
      %v259 = vunpack.c.h.b16 %v229
      %v260 = vunpack.c.l.b16 %v230
      %v261 = vunpack.c.h.b16 %v230
      %v262 = vpack.c.b16 %v258, %v254
      %v263 = vpack.c.b16 %v259, %v255
      %v264 = vpack.c.b16 %v260, %v256
      %v265 = vpack.c.b16 %v261, %v257
      %266 = vrot.lane.b32.xlu0 %v262, 127
      %v267 = vpop.permute.xlu0 %266
      %268 = vrot.lane.b32.xlu0 %v263, 127
      %v269 = vpop.permute.xlu0 %268
      %270 = vrot.lane.b32.xlu0 %v264, 127
      %v271 = vpop.permute.xlu0 %270
      %272 = vrot.lane.b32.xlu0 %v265, 127
      %v273 = vpop.permute.xlu0 %272
      %vm274 = vcmask 1039360
      %v275 = vsel %vm274, %v267, %v269
      %v276 = vsel %vm274, %v269, %v271
      %v277 = vsel %vm274, %v271, %v273
      %vm281 = vcmask 130048
      %v283 = vsel %vm281, %v248, 0
      %v286 = vsel %vm281, %v249, 0
      %288 = vmatprep.subr.bf16.mxu0 0
      %289 = vmatpush1.bf16.msra.mxu0 0
      %290 = vmatprep.subr.bf16.mxu0 0
      %291 = vmatpush1.bf16.msra.mxu0 0
      %292 = vmatprep.subr.bf16.mxu0 0
      %293 = vmatpush1.bf16.msra.mxu0 0
      %294 = vmatprep.subr.bf16.mxu0 0
      %295 = vmatpush1.bf16.msra.mxu0 0
      %296 = vmatprep.subr.bf16.mxu0 0
      %297 = vmatpush1.bf16.msra.mxu0 0
      %298 = vmatprep.subr.bf16.mxu0 0
      %299 = vmatpush1.bf16.msra.mxu0 0
      %300 = vmatprep.subr.bf16.mxu0 0
      %301 = vmatpush1.bf16.msra.mxu0 0
      %302 = vmatprep.subr.bf16.mxu0 %v276
      %303 = vmatpush1.bf16.msra.mxu0 %v275
      %304 = vmatprep.subr.bf16.mxu0 0
      %305 = vmatpush2.bf16.msra.mxu0 0
      %306 = vmatprep.subr.bf16.mxu0 0
      %307 = vmatpush2.bf16.msra.mxu0 0
      %308 = vmatprep.subr.bf16.mxu0 0
      %309 = vmatpush2.bf16.msra.mxu0 0
      %310 = vmatprep.subr.bf16.mxu0 0
      %311 = vmatpush2.bf16.msra.mxu0 0
      %312 = vmatprep.subr.bf16.mxu0 0
      %313 = vmatpush2.bf16.msra.mxu0 0
      %314 = vmatprep.subr.bf16.mxu0 0
      %315 = vmatpush2.bf16.msra.mxu0 0
      %316 = vmatprep.subr.bf16.mxu0 0
      %317 = vmatpush2.bf16.msra.mxu0 0
      %318 = vmatprep.subr.bf16.mxu0 0
      %319 = vmatpush2.bf16.msra.mxu0 0
      %320 = vmatprep.mubr.bf16.mxu0 0
      %321 = vmatmul.mubr.bf16.gmra.mxu0 %v283
      %v322 = vpop.f32.mrf.mxu0
      %v323 = vadd.f32 0.0, %v322
      %v324 = vpop.f32.mrf.mxu0
      %v325 = vadd.f32 0.0, %v324
      %v326 = vpop.f32.mrf.mxu0
      %v327 = vadd.f32 0.0, %v326
      %v328 = vpop.f32.mrf.mxu0
      %v329 = vadd.f32 0.0, %v328
      %330 = vmatprep.mubr.bf16.mxu0 0
      %331 = vmatmul.mubr.bf16.gmra.mxu0 %v286
      %v332 = vpop.f32.mrf.mxu0
      %v333 = vadd.f32 0.0, %v332
      %v334 = vpop.f32.mrf.mxu0
      %v335 = vadd.f32 0.0, %v334
      %v336 = vpop.f32.mrf.mxu0
      %v337 = vadd.f32 0.0, %v336
      %v338 = vpop.f32.mrf.mxu0
      %v339 = vadd.f32 0.0, %v338
      %340 = vdwg.mxu0
      %341 = vmatprep.subr.bf16.mxu0 0
      %342 = vmatpush1.bf16.msra.mxu0 0
      %343 = vmatprep.subr.bf16.mxu0 0
      %344 = vmatpush1.bf16.msra.mxu0 0
      %345 = vmatprep.subr.bf16.mxu0 0
      %346 = vmatpush1.bf16.msra.mxu0 0
      %347 = vmatprep.subr.bf16.mxu0 0
      %348 = vmatpush1.bf16.msra.mxu0 0
      %349 = vmatprep.subr.bf16.mxu0 0
      %350 = vmatpush1.bf16.msra.mxu0 0
      %351 = vmatprep.subr.bf16.mxu0 0
      %352 = vmatpush1.bf16.msra.mxu0 0
      %353 = vmatprep.subr.bf16.mxu0 0
      %354 = vmatpush1.bf16.msra.mxu0 0
      %355 = vmatprep.subr.bf16.mxu0 0
      %356 = vmatpush1.bf16.msra.mxu0 %v277
      %357 = vmatprep.subr.bf16.mxu0 0
      %358 = vmatpush2.bf16.msra.mxu0 0
      %359 = vmatprep.subr.bf16.mxu0 0
      %360 = vmatpush2.bf16.msra.mxu0 0
      %361 = vmatprep.subr.bf16.mxu0 0
      %362 = vmatpush2.bf16.msra.mxu0 0
      %363 = vmatprep.subr.bf16.mxu0 0
      %364 = vmatpush2.bf16.msra.mxu0 0
      %365 = vmatprep.subr.bf16.mxu0 0
      %366 = vmatpush2.bf16.msra.mxu0 0
      %367 = vmatprep.subr.bf16.mxu0 0
      %368 = vmatpush2.bf16.msra.mxu0 0
      %369 = vmatprep.subr.bf16.mxu0 0
      %370 = vmatpush2.bf16.msra.mxu0 0
      %371 = vmatprep.subr.bf16.mxu0 0
      %372 = vmatpush2.bf16.msra.mxu0 0
      %373 = vmatprep.mubr.bf16.mxu0 0
      %374 = vmatmul.mubr.bf16.gmra.mxu0 %v283
      %v375 = vpop.f32.mrf.mxu0
      %v376 = vadd.f32 0.0, %v375
      %v377 = vpop.f32.mrf.mxu0
      %v378 = vpop.f32.mrf.mxu0
      %v379 = vadd.f32 0.0, %v378
      %v380 = vpop.f32.mrf.mxu0
      %381 = vmatprep.mubr.bf16.mxu0 0
      %382 = vmatmul.mubr.bf16.gmra.mxu0 %v286
      %v383 = vpop.f32.mrf.mxu0
      %v384 = vadd.f32 0.0, %v383
      %v385 = vpop.f32.mrf.mxu0
      %v386 = vpop.f32.mrf.mxu0
      %v387 = vadd.f32 0.0, %v386
      %v388 = vpop.f32.mrf.mxu0
      %389 = vdwg.mxu0
      %v394 = vunpack.c.l.b16 %v231
      %v395 = vunpack.c.l.b16 %v232
      %v396 = vunpack.c.l.b16 %v233
      %v397 = vunpack.c.l.b16 %v234
      %v398 = vpack.c.b16 %v395, %v394
      %v399 = vpack.c.b16 %v397, %v396
      %v404 = vsel %vm281, %v398, 0
      %v407 = vsel %vm281, %v399, 0
      %409 = vmatprep.subr.bf16.mxu0 0
      %410 = vmatpush1.bf16.msra.mxu0 0
      %411 = vmatprep.subr.bf16.mxu0 0
      %412 = vmatpush1.bf16.msra.mxu0 0
      %413 = vmatprep.subr.bf16.mxu0 0
      %414 = vmatpush1.bf16.msra.mxu0 0
      %415 = vmatprep.subr.bf16.mxu0 0
      %416 = vmatpush1.bf16.msra.mxu0 0
      %417 = vmatprep.subr.bf16.mxu0 0
      %418 = vmatpush1.bf16.msra.mxu0 0
      %419 = vmatprep.subr.bf16.mxu0 0
      %420 = vmatpush1.bf16.msra.mxu0 0
      %421 = vmatprep.subr.bf16.mxu0 0
      %422 = vmatpush1.bf16.msra.mxu0 0
      %423 = vmatprep.subr.bf16.mxu0 %v263
      %424 = vmatpush1.bf16.msra.mxu0 %v262
      %425 = vmatprep.subr.bf16.mxu0 0
      %426 = vmatpush2.bf16.msra.mxu0 0
      %427 = vmatprep.subr.bf16.mxu0 0
      %428 = vmatpush2.bf16.msra.mxu0 0
      %429 = vmatprep.subr.bf16.mxu0 0
      %430 = vmatpush2.bf16.msra.mxu0 0
      %431 = vmatprep.subr.bf16.mxu0 0
      %432 = vmatpush2.bf16.msra.mxu0 0
      %433 = vmatprep.subr.bf16.mxu0 0
      %434 = vmatpush2.bf16.msra.mxu0 0
      %435 = vmatprep.subr.bf16.mxu0 0
      %436 = vmatpush2.bf16.msra.mxu0 0
      %437 = vmatprep.subr.bf16.mxu0 0
      %438 = vmatpush2.bf16.msra.mxu0 0
      %439 = vmatprep.subr.bf16.mxu0 0
      %440 = vmatpush2.bf16.msra.mxu0 0
      %441 = vmatprep.mubr.bf16.mxu0 0
      %442 = vmatmul.mubr.bf16.gmra.mxu0 %v404
      %v443 = vpop.f32.mrf.mxu0
      %v444 = vadd.f32 %v323, %v443
      %v445 = vpop.f32.mrf.mxu0
      %v446 = vadd.f32 %v325, %v445
      %v447 = vpop.f32.mrf.mxu0
      %v448 = vadd.f32 %v327, %v447
      %v449 = vpop.f32.mrf.mxu0
      %v450 = vadd.f32 %v329, %v449
      %451 = vmatprep.mubr.bf16.mxu0 0
      %452 = vmatmul.mubr.bf16.gmra.mxu0 %v407
      %v453 = vpop.f32.mrf.mxu0
      %v454 = vadd.f32 %v333, %v453
      %v455 = vpop.f32.mrf.mxu0
      %v456 = vadd.f32 %v335, %v455
      %v457 = vpop.f32.mrf.mxu0
      %v458 = vadd.f32 %v337, %v457
      %v459 = vpop.f32.mrf.mxu0
      %v460 = vadd.f32 %v339, %v459
      %461 = vdwg.mxu0
      %462 = vmatprep.subr.bf16.mxu0 0
      %463 = vmatpush1.bf16.msra.mxu0 0
      %464 = vmatprep.subr.bf16.mxu0 0
      %465 = vmatpush1.bf16.msra.mxu0 0
      %466 = vmatprep.subr.bf16.mxu0 0
      %467 = vmatpush1.bf16.msra.mxu0 0
      %468 = vmatprep.subr.bf16.mxu0 0
      %469 = vmatpush1.bf16.msra.mxu0 0
      %470 = vmatprep.subr.bf16.mxu0 0
      %471 = vmatpush1.bf16.msra.mxu0 0
      %472 = vmatprep.subr.bf16.mxu0 0
      %473 = vmatpush1.bf16.msra.mxu0 0
      %474 = vmatprep.subr.bf16.mxu0 0
      %475 = vmatpush1.bf16.msra.mxu0 0
      %476 = vmatprep.subr.bf16.mxu0 0
      %477 = vmatpush1.bf16.msra.mxu0 %v264
      %478 = vmatprep.subr.bf16.mxu0 0
      %479 = vmatpush2.bf16.msra.mxu0 0
      %480 = vmatprep.subr.bf16.mxu0 0
      %481 = vmatpush2.bf16.msra.mxu0 0
      %482 = vmatprep.subr.bf16.mxu0 0
      %483 = vmatpush2.bf16.msra.mxu0 0
      %484 = vmatprep.subr.bf16.mxu0 0
      %485 = vmatpush2.bf16.msra.mxu0 0
      %486 = vmatprep.subr.bf16.mxu0 0
      %487 = vmatpush2.bf16.msra.mxu0 0
      %488 = vmatprep.subr.bf16.mxu0 0
      %489 = vmatpush2.bf16.msra.mxu0 0
      %490 = vmatprep.subr.bf16.mxu0 0
      %491 = vmatpush2.bf16.msra.mxu0 0
      %492 = vmatprep.subr.bf16.mxu0 0
      %493 = vmatpush2.bf16.msra.mxu0 0
      %494 = vmatprep.mubr.bf16.mxu0 0
      %495 = vmatmul.mubr.bf16.gmra.mxu0 %v404
      %v496 = vpop.f32.mrf.mxu0
      %v497 = vadd.f32 %v376, %v496
      %v498 = vpop.f32.mrf.mxu0
      %v499 = vpop.f32.mrf.mxu0
      %v500 = vadd.f32 %v379, %v499
      %v501 = vpop.f32.mrf.mxu0
      %502 = vmatprep.mubr.bf16.mxu0 0
      %503 = vmatmul.mubr.bf16.gmra.mxu0 %v407
      %v504 = vpop.f32.mrf.mxu0
      %v505 = vadd.f32 %v384, %v504
      %v506 = vpop.f32.mrf.mxu0
      %v507 = vpop.f32.mrf.mxu0
      %v508 = vadd.f32 %v387, %v507
      %v509 = vpop.f32.mrf.mxu0
      %510 = vdwg.mxu0
      %s511 = scalar_lea.vmem %s1, 32
      %v512 = vld [vmem:[%s511] sm:$0xf]
      %v513 = vld [vmem:[%s511 + $0x4] sm:$0xf]
      %v514 = vld [vmem:[%s511 + $0x8] sm:$0xf]
      %v515 = vld [vmem:[%s511 + $0xc] sm:$0xf]
      %v520 = vunpack.c.l.b16 %v512
      %v521 = vunpack.c.l.b16 %v513
      %v522 = vunpack.c.l.b16 %v514
      %v523 = vunpack.c.l.b16 %v515
      %v524 = vpack.c.b16 %v521, %v520
      %v525 = vpack.c.b16 %v523, %v522
      %526 = vrot.lane.b32.xlu0 %v262, 126
      %v527 = vpop.permute.xlu0 %526
      %528 = vrot.lane.b32.xlu0 %v263, 126
      %v529 = vpop.permute.xlu0 %528
      %530 = vrot.lane.b32.xlu0 %v264, 126
      %v531 = vpop.permute.xlu0 %530
      %532 = vrot.lane.b32.xlu0 %v265, 126
      %v533 = vpop.permute.xlu0 %532
      %vm534 = vcmask 1031168
      %v535 = vsel %vm534, %v527, %v529
      %v536 = vsel %vm534, %v529, %v531
      %v537 = vsel %vm534, %v531, %v533
      %v542 = vsel %vm281, %v524, 0
      %v545 = vsel %vm281, %v525, 0
      %547 = vmatprep.subr.bf16.mxu0 0
      %548 = vmatpush1.bf16.msra.mxu0 0
      %549 = vmatprep.subr.bf16.mxu0 0
      %550 = vmatpush1.bf16.msra.mxu0 0
      %551 = vmatprep.subr.bf16.mxu0 0
      %552 = vmatpush1.bf16.msra.mxu0 0
      %553 = vmatprep.subr.bf16.mxu0 0
      %554 = vmatpush1.bf16.msra.mxu0 0
      %555 = vmatprep.subr.bf16.mxu0 0
      %556 = vmatpush1.bf16.msra.mxu0 0
      %557 = vmatprep.subr.bf16.mxu0 0
      %558 = vmatpush1.bf16.msra.mxu0 0
      %559 = vmatprep.subr.bf16.mxu0 0
      %560 = vmatpush1.bf16.msra.mxu0 0
      %561 = vmatprep.subr.bf16.mxu0 %v536
      %562 = vmatpush1.bf16.msra.mxu0 %v535
      %563 = vmatprep.subr.bf16.mxu0 0
      %564 = vmatpush2.bf16.msra.mxu0 0
      %565 = vmatprep.subr.bf16.mxu0 0
      %566 = vmatpush2.bf16.msra.mxu0 0
      %567 = vmatprep.subr.bf16.mxu0 0
      %568 = vmatpush2.bf16.msra.mxu0 0
      %569 = vmatprep.subr.bf16.mxu0 0
      %570 = vmatpush2.bf16.msra.mxu0 0
      %571 = vmatprep.subr.bf16.mxu0 0
      %572 = vmatpush2.bf16.msra.mxu0 0
      %573 = vmatprep.subr.bf16.mxu0 0
      %574 = vmatpush2.bf16.msra.mxu0 0
      %575 = vmatprep.subr.bf16.mxu0 0
      %576 = vmatpush2.bf16.msra.mxu0 0
      %577 = vmatprep.subr.bf16.mxu0 0
      %578 = vmatpush2.bf16.msra.mxu0 0
      %579 = vmatprep.mubr.bf16.mxu0 0
      %580 = vmatmul.mubr.bf16.gmra.mxu0 %v542
      %v581 = vpop.f32.mrf.mxu0
      %v582 = vadd.f32 0.0, %v581
      %v583 = vpop.f32.mrf.mxu0
      %v584 = vadd.f32 0.0, %v583
      %v585 = vpop.f32.mrf.mxu0
      %v586 = vadd.f32 0.0, %v585
      %v587 = vpop.f32.mrf.mxu0
      %v588 = vadd.f32 0.0, %v587
      %589 = vmatprep.mubr.bf16.mxu0 0
      %590 = vmatmul.mubr.bf16.gmra.mxu0 %v545
      %v591 = vpop.f32.mrf.mxu0
      %v592 = vadd.f32 0.0, %v591
      %v593 = vpop.f32.mrf.mxu0
      %v594 = vadd.f32 0.0, %v593
      %v595 = vpop.f32.mrf.mxu0
      %v596 = vadd.f32 0.0, %v595
      %v597 = vpop.f32.mrf.mxu0
      %v598 = vadd.f32 0.0, %v597
      %599 = vdwg.mxu0
      %600 = vmatprep.subr.bf16.mxu0 0
      %601 = vmatpush1.bf16.msra.mxu0 0
      %602 = vmatprep.subr.bf16.mxu0 0
      %603 = vmatpush1.bf16.msra.mxu0 0
      %604 = vmatprep.subr.bf16.mxu0 0
      %605 = vmatpush1.bf16.msra.mxu0 0
      %606 = vmatprep.subr.bf16.mxu0 0
      %607 = vmatpush1.bf16.msra.mxu0 0
      %608 = vmatprep.subr.bf16.mxu0 0
      %609 = vmatpush1.bf16.msra.mxu0 0
      %610 = vmatprep.subr.bf16.mxu0 0
      %611 = vmatpush1.bf16.msra.mxu0 0
      %612 = vmatprep.subr.bf16.mxu0 0
      %613 = vmatpush1.bf16.msra.mxu0 0
      %614 = vmatprep.subr.bf16.mxu0 0
      %615 = vmatpush1.bf16.msra.mxu0 %v537
      %616 = vmatprep.subr.bf16.mxu0 0
      %617 = vmatpush2.bf16.msra.mxu0 0
      %618 = vmatprep.subr.bf16.mxu0 0
      %619 = vmatpush2.bf16.msra.mxu0 0
      %620 = vmatprep.subr.bf16.mxu0 0
      %621 = vmatpush2.bf16.msra.mxu0 0
      %622 = vmatprep.subr.bf16.mxu0 0
      %623 = vmatpush2.bf16.msra.mxu0 0
      %624 = vmatprep.subr.bf16.mxu0 0
      %625 = vmatpush2.bf16.msra.mxu0 0
      %626 = vmatprep.subr.bf16.mxu0 0
      %627 = vmatpush2.bf16.msra.mxu0 0
      %628 = vmatprep.subr.bf16.mxu0 0
      %629 = vmatpush2.bf16.msra.mxu0 0
      %630 = vmatprep.subr.bf16.mxu0 0
      %631 = vmatpush2.bf16.msra.mxu0 0
      %632 = vmatprep.mubr.bf16.mxu0 0
      %633 = vmatmul.mubr.bf16.gmra.mxu0 %v542
      %v634 = vpop.f32.mrf.mxu0
      %v635 = vadd.f32 0.0, %v634
      %v636 = vpop.f32.mrf.mxu0
      %v637 = vpop.f32.mrf.mxu0
      %v638 = vadd.f32 0.0, %v637
      %v639 = vpop.f32.mrf.mxu0
      %640 = vmatprep.mubr.bf16.mxu0 0
      %641 = vmatmul.mubr.bf16.gmra.mxu0 %v545
      %v642 = vpop.f32.mrf.mxu0
      %v643 = vadd.f32 0.0, %v642
      %v644 = vpop.f32.mrf.mxu0
      %v645 = vpop.f32.mrf.mxu0
      %v646 = vadd.f32 0.0, %v645
      %v647 = vpop.f32.mrf.mxu0
      %648 = vdwg.mxu0
      %v649 = vadd.f32 %v444, %v582
      %v650 = vadd.f32 %v446, %v584
      %v651 = vadd.f32 %v497, %v635
      %v652 = vadd.f32 %v448, %v586
      %v653 = vadd.f32 %v450, %v588
      %v654 = vadd.f32 %v500, %v638
      %v655 = vadd.f32 %v454, %v592
      %v656 = vadd.f32 %v456, %v594
      %v657 = vadd.f32 %v505, %v643
      %v658 = vadd.f32 %v458, %v596
      %v659 = vadd.f32 %v460, %v598
      %v660 = vadd.f32 %v508, %v646
      %s661 = scalar_lea.vmem %s1, 48
      %v662 = vld [vmem:[%s661] sm:$0xf]
      %v663 = vld [vmem:[%s661 + $0x4] sm:$0xf]
      %v664 = vld [vmem:[%s661 + $0x8] sm:$0xf]
      %v665 = vld [vmem:[%s661 + $0xc] sm:$0xf]
      %v670 = vunpack.c.l.b16 %v662
      %v671 = vunpack.c.l.b16 %v663
      %v672 = vunpack.c.l.b16 %v664
      %v673 = vunpack.c.l.b16 %v665
      %v674 = vpack.c.b16 %v671, %v670
      %v675 = vpack.c.b16 %v673, %v672
      %676 = vrot.lane.b32.xlu0 %v262, 110
      %v677 = vpop.permute.xlu0 %676
      %678 = vrot.lane.b32.xlu0 %v263, 110
      %v679 = vpop.permute.xlu0 %678
      %680 = vrot.lane.b32.xlu0 %v264, 110
      %v681 = vpop.permute.xlu0 %680
      %682 = vrot.lane.b32.xlu0 %v265, 110
      %v683 = vpop.permute.xlu0 %682
      %vm684 = vcmask 900096
      %v685 = vsel %vm684, %v677, %v679
      %v686 = vsel %vm684, %v679, %v681
      %v687 = vsel %vm684, %v681, %v683
      %v692 = vsel %vm281, %v674, 0
      %v695 = vsel %vm281, %v675, 0
      %697 = vmatprep.subr.bf16.mxu0 0
      %698 = vmatpush1.bf16.msra.mxu0 0
      %699 = vmatprep.subr.bf16.mxu0 0
      %700 = vmatpush1.bf16.msra.mxu0 0
      %701 = vmatprep.subr.bf16.mxu0 0
      %702 = vmatpush1.bf16.msra.mxu0 0
      %703 = vmatprep.subr.bf16.mxu0 0
      %704 = vmatpush1.bf16.msra.mxu0 0
      %705 = vmatprep.subr.bf16.mxu0 0
      %706 = vmatpush1.bf16.msra.mxu0 0
      %707 = vmatprep.subr.bf16.mxu0 0
      %708 = vmatpush1.bf16.msra.mxu0 0
      %709 = vmatprep.subr.bf16.mxu0 0
      %710 = vmatpush1.bf16.msra.mxu0 0
      %711 = vmatprep.subr.bf16.mxu0 %v686
      %712 = vmatpush1.bf16.msra.mxu0 %v685
      %713 = vmatprep.subr.bf16.mxu0 0
      %714 = vmatpush2.bf16.msra.mxu0 0
      %715 = vmatprep.subr.bf16.mxu0 0
      %716 = vmatpush2.bf16.msra.mxu0 0
      %717 = vmatprep.subr.bf16.mxu0 0
      %718 = vmatpush2.bf16.msra.mxu0 0
      %719 = vmatprep.subr.bf16.mxu0 0
      %720 = vmatpush2.bf16.msra.mxu0 0
      %721 = vmatprep.subr.bf16.mxu0 0
      %722 = vmatpush2.bf16.msra.mxu0 0
      %723 = vmatprep.subr.bf16.mxu0 0
      %724 = vmatpush2.bf16.msra.mxu0 0
      %725 = vmatprep.subr.bf16.mxu0 0
      %726 = vmatpush2.bf16.msra.mxu0 0
      %727 = vmatprep.subr.bf16.mxu0 0
      %728 = vmatpush2.bf16.msra.mxu0 0
      %729 = vmatprep.mubr.bf16.mxu0 0
      %730 = vmatmul.mubr.bf16.gmra.mxu0 %v692
      %v731 = vpop.f32.mrf.mxu0
      %v732 = vadd.f32 0.0, %v731
      %v733 = vpop.f32.mrf.mxu0
      %v734 = vadd.f32 0.0, %v733
      %v735 = vpop.f32.mrf.mxu0
      %v736 = vadd.f32 0.0, %v735
      %v737 = vpop.f32.mrf.mxu0
      %v738 = vadd.f32 0.0, %v737
      %739 = vmatprep.mubr.bf16.mxu0 0
      %740 = vmatmul.mubr.bf16.gmra.mxu0 %v695
      %v741 = vpop.f32.mrf.mxu0
      %v742 = vadd.f32 0.0, %v741
      %v743 = vpop.f32.mrf.mxu0
      %v744 = vadd.f32 0.0, %v743
      %v745 = vpop.f32.mrf.mxu0
      %v746 = vadd.f32 0.0, %v745
      %v747 = vpop.f32.mrf.mxu0
      %v748 = vadd.f32 0.0, %v747
      %749 = vdwg.mxu0
      %750 = vmatprep.subr.bf16.mxu0 0
      %751 = vmatpush1.bf16.msra.mxu0 0
      %752 = vmatprep.subr.bf16.mxu0 0
      %753 = vmatpush1.bf16.msra.mxu0 0
      %754 = vmatprep.subr.bf16.mxu0 0
      %755 = vmatpush1.bf16.msra.mxu0 0
      %756 = vmatprep.subr.bf16.mxu0 0
      %757 = vmatpush1.bf16.msra.mxu0 0
      %758 = vmatprep.subr.bf16.mxu0 0
      %759 = vmatpush1.bf16.msra.mxu0 0
      %760 = vmatprep.subr.bf16.mxu0 0
      %761 = vmatpush1.bf16.msra.mxu0 0
      %762 = vmatprep.subr.bf16.mxu0 0
      %763 = vmatpush1.bf16.msra.mxu0 0
      %764 = vmatprep.subr.bf16.mxu0 0
      %765 = vmatpush1.bf16.msra.mxu0 %v687
      %766 = vmatprep.subr.bf16.mxu0 0
      %767 = vmatpush2.bf16.msra.mxu0 0
      %768 = vmatprep.subr.bf16.mxu0 0
      %769 = vmatpush2.bf16.msra.mxu0 0
      %770 = vmatprep.subr.bf16.mxu0 0
      %771 = vmatpush2.bf16.msra.mxu0 0
      %772 = vmatprep.subr.bf16.mxu0 0
      %773 = vmatpush2.bf16.msra.mxu0 0
      %774 = vmatprep.subr.bf16.mxu0 0
      %775 = vmatpush2.bf16.msra.mxu0 0
      %776 = vmatprep.subr.bf16.mxu0 0
      %777 = vmatpush2.bf16.msra.mxu0 0
      %778 = vmatprep.subr.bf16.mxu0 0
      %779 = vmatpush2.bf16.msra.mxu0 0
      %780 = vmatprep.subr.bf16.mxu0 0
      %781 = vmatpush2.bf16.msra.mxu0 0
      %782 = vmatprep.mubr.bf16.mxu0 0
      %783 = vmatmul.mubr.bf16.gmra.mxu0 %v692
      %v784 = vpop.f32.mrf.mxu0
      %v785 = vadd.f32 0.0, %v784
      %v786 = vpop.f32.mrf.mxu0
      %v787 = vpop.f32.mrf.mxu0
      %v788 = vadd.f32 0.0, %v787
      %v789 = vpop.f32.mrf.mxu0
      %790 = vmatprep.mubr.bf16.mxu0 0
      %791 = vmatmul.mubr.bf16.gmra.mxu0 %v695
      %v792 = vpop.f32.mrf.mxu0
      %v793 = vadd.f32 0.0, %v792
      %v794 = vpop.f32.mrf.mxu0
      %v795 = vpop.f32.mrf.mxu0
      %v796 = vadd.f32 0.0, %v795
      %v797 = vpop.f32.mrf.mxu0
      %798 = vdwg.mxu0
      %v799 = vadd.f32 %v649, %v732
      %v800 = vadd.f32 %v650, %v734
      %v801 = vadd.f32 %v651, %v785
      %v802 = vadd.f32 %v652, %v736
      %v803 = vadd.f32 %v653, %v738
      %v804 = vadd.f32 %v654, %v788
      %v805 = vadd.f32 %v655, %v742
      %v806 = vadd.f32 %v656, %v744
      %v807 = vadd.f32 %v657, %v793
      %v808 = vadd.f32 %v658, %v746
      %v809 = vadd.f32 %v659, %v748
      %v810 = vadd.f32 %v660, %v796
      %s811 = scalar_lea.vmem %s1, 64
      %v812 = vld [vmem:[%s811] sm:$0xf]
      %v813 = vld [vmem:[%s811 + $0x4] sm:$0xf]
      %v814 = vld [vmem:[%s811 + $0x8] sm:$0xf]
      %v815 = vld [vmem:[%s811 + $0xc] sm:$0xf]
      %v820 = vunpack.c.l.b16 %v812
      %v821 = vunpack.c.l.b16 %v813
      %v822 = vunpack.c.l.b16 %v814
      %v823 = vunpack.c.l.b16 %v815
      %v824 = vpack.c.b16 %v821, %v820
      %v825 = vpack.c.b16 %v823, %v822
      %826 = vrot.lane.b32.xlu0 %v262, 109
      %v827 = vpop.permute.xlu0 %826
      %828 = vrot.lane.b32.xlu0 %v263, 109
      %v829 = vpop.permute.xlu0 %828
      %830 = vrot.lane.b32.xlu0 %v264, 109
      %v831 = vpop.permute.xlu0 %830
      %832 = vrot.lane.b32.xlu0 %v265, 109
      %v833 = vpop.permute.xlu0 %832
      %vm834 = vcmask 891904
      %v835 = vsel %vm834, %v827, %v829
      %v836 = vsel %vm834, %v829, %v831
      %v837 = vsel %vm834, %v831, %v833
      %v842 = vsel %vm281, %v824, 0
      %v845 = vsel %vm281, %v825, 0
      %847 = vmatprep.subr.bf16.mxu0 0
      %848 = vmatpush1.bf16.msra.mxu0 0
      %849 = vmatprep.subr.bf16.mxu0 0
      %850 = vmatpush1.bf16.msra.mxu0 0
      %851 = vmatprep.subr.bf16.mxu0 0
      %852 = vmatpush1.bf16.msra.mxu0 0
      %853 = vmatprep.subr.bf16.mxu0 0
      %854 = vmatpush1.bf16.msra.mxu0 0
      %855 = vmatprep.subr.bf16.mxu0 0
      %856 = vmatpush1.bf16.msra.mxu0 0
      %857 = vmatprep.subr.bf16.mxu0 0
      %858 = vmatpush1.bf16.msra.mxu0 0
      %859 = vmatprep.subr.bf16.mxu0 0
      %860 = vmatpush1.bf16.msra.mxu0 0
      %861 = vmatprep.subr.bf16.mxu0 %v836
      %862 = vmatpush1.bf16.msra.mxu0 %v835
      %863 = vmatprep.subr.bf16.mxu0 0
      %864 = vmatpush2.bf16.msra.mxu0 0
      %865 = vmatprep.subr.bf16.mxu0 0
      %866 = vmatpush2.bf16.msra.mxu0 0
      %867 = vmatprep.subr.bf16.mxu0 0
      %868 = vmatpush2.bf16.msra.mxu0 0
      %869 = vmatprep.subr.bf16.mxu0 0
      %870 = vmatpush2.bf16.msra.mxu0 0
      %871 = vmatprep.subr.bf16.mxu0 0
      %872 = vmatpush2.bf16.msra.mxu0 0
      %873 = vmatprep.subr.bf16.mxu0 0
      %874 = vmatpush2.bf16.msra.mxu0 0
      %875 = vmatprep.subr.bf16.mxu0 0
      %876 = vmatpush2.bf16.msra.mxu0 0
      %877 = vmatprep.subr.bf16.mxu0 0
      %878 = vmatpush2.bf16.msra.mxu0 0
      %879 = vmatprep.mubr.bf16.mxu0 0
      %880 = vmatmul.mubr.bf16.gmra.mxu0 %v842
      %v881 = vpop.f32.mrf.mxu0
      %v882 = vadd.f32 0.0, %v881
      %v883 = vpop.f32.mrf.mxu0
      %v884 = vadd.f32 0.0, %v883
      %v885 = vpop.f32.mrf.mxu0
      %v886 = vadd.f32 0.0, %v885
      %v887 = vpop.f32.mrf.mxu0
      %v888 = vadd.f32 0.0, %v887
      %889 = vmatprep.mubr.bf16.mxu0 0
      %890 = vmatmul.mubr.bf16.gmra.mxu0 %v845
      %v891 = vpop.f32.mrf.mxu0
      %v892 = vadd.f32 0.0, %v891
      %v893 = vpop.f32.mrf.mxu0
      %v894 = vadd.f32 0.0, %v893
      %v895 = vpop.f32.mrf.mxu0
      %v896 = vadd.f32 0.0, %v895
      %v897 = vpop.f32.mrf.mxu0
      %v898 = vadd.f32 0.0, %v897
      %899 = vdwg.mxu0
      %900 = vmatprep.subr.bf16.mxu0 0
      %901 = vmatpush1.bf16.msra.mxu0 0
      %902 = vmatprep.subr.bf16.mxu0 0
      %903 = vmatpush1.bf16.msra.mxu0 0
      %904 = vmatprep.subr.bf16.mxu0 0
      %905 = vmatpush1.bf16.msra.mxu0 0
      %906 = vmatprep.subr.bf16.mxu0 0
      %907 = vmatpush1.bf16.msra.mxu0 0
      %908 = vmatprep.subr.bf16.mxu0 0
      %909 = vmatpush1.bf16.msra.mxu0 0
      %910 = vmatprep.subr.bf16.mxu0 0
      %911 = vmatpush1.bf16.msra.mxu0 0
      %912 = vmatprep.subr.bf16.mxu0 0
      %913 = vmatpush1.bf16.msra.mxu0 0
      %914 = vmatprep.subr.bf16.mxu0 0
      %915 = vmatpush1.bf16.msra.mxu0 %v837
      %916 = vmatprep.subr.bf16.mxu0 0
      %917 = vmatpush2.bf16.msra.mxu0 0
      %918 = vmatprep.subr.bf16.mxu0 0
      %919 = vmatpush2.bf16.msra.mxu0 0
      %920 = vmatprep.subr.bf16.mxu0 0
      %921 = vmatpush2.bf16.msra.mxu0 0
      %922 = vmatprep.subr.bf16.mxu0 0
      %923 = vmatpush2.bf16.msra.mxu0 0
      %924 = vmatprep.subr.bf16.mxu0 0
      %925 = vmatpush2.bf16.msra.mxu0 0
      %926 = vmatprep.subr.bf16.mxu0 0
      %927 = vmatpush2.bf16.msra.mxu0 0
      %928 = vmatprep.subr.bf16.mxu0 0
      %929 = vmatpush2.bf16.msra.mxu0 0
      %930 = vmatprep.subr.bf16.mxu0 0
      %931 = vmatpush2.bf16.msra.mxu0 0
      %932 = vmatprep.mubr.bf16.mxu0 0
      %933 = vmatmul.mubr.bf16.gmra.mxu0 %v842
      %v934 = vpop.f32.mrf.mxu0
      %v935 = vadd.f32 0.0, %v934
      %v936 = vpop.f32.mrf.mxu0
      %v937 = vpop.f32.mrf.mxu0
      %v938 = vadd.f32 0.0, %v937
      %v939 = vpop.f32.mrf.mxu0
      %940 = vmatprep.mubr.bf16.mxu0 0
      %941 = vmatmul.mubr.bf16.gmra.mxu0 %v845
      %v942 = vpop.f32.mrf.mxu0
      %v943 = vadd.f32 0.0, %v942
      %v944 = vpop.f32.mrf.mxu0
      %v945 = vpop.f32.mrf.mxu0
      %v946 = vadd.f32 0.0, %v945
      %v947 = vpop.f32.mrf.mxu0
      %948 = vdwg.mxu0
      %v949 = vadd.f32 %v799, %v882
      %v950 = vadd.f32 %v800, %v884
      %v951 = vadd.f32 %v801, %v935
      %v952 = vadd.f32 %v802, %v886
      %v953 = vadd.f32 %v803, %v888
      %v954 = vadd.f32 %v804, %v938
      %v955 = vadd.f32 %v805, %v892
      %v956 = vadd.f32 %v806, %v894
      %v957 = vadd.f32 %v807, %v943
      %v958 = vadd.f32 %v808, %v896
      %v959 = vadd.f32 %v809, %v898
      %v960 = vadd.f32 %v810, %v946
      %s961 = scalar_lea.vmem %s1, 80
      %v962 = vld [vmem:[%s961] sm:$0xf]
      %v963 = vld [vmem:[%s961 + $0x4] sm:$0xf]
      %v964 = vld [vmem:[%s961 + $0x8] sm:$0xf]
      %v965 = vld [vmem:[%s961 + $0xc] sm:$0xf]
      %v970 = vunpack.c.l.b16 %v962
      %v971 = vunpack.c.l.b16 %v963
      %v972 = vunpack.c.l.b16 %v964
      %v973 = vunpack.c.l.b16 %v965
      %v974 = vpack.c.b16 %v971, %v970
      %v975 = vpack.c.b16 %v973, %v972
      %976 = vrot.lane.b32.xlu0 %v262, 108
      %v977 = vpop.permute.xlu0 %976
      %978 = vrot.lane.b32.xlu0 %v263, 108
      %v979 = vpop.permute.xlu0 %978
      %980 = vrot.lane.b32.xlu0 %v264, 108
      %v981 = vpop.permute.xlu0 %980
      %982 = vrot.lane.b32.xlu0 %v265, 108
      %v983 = vpop.permute.xlu0 %982
      %vm984 = vcmask 883712
      %v985 = vsel %vm984, %v977, %v979
      %v986 = vsel %vm984, %v979, %v981
      %v987 = vsel %vm984, %v981, %v983
      %v992 = vsel %vm281, %v974, 0
      %v995 = vsel %vm281, %v975, 0
      %997 = vmatprep.subr.bf16.mxu0 0
      %998 = vmatpush1.bf16.msra.mxu0 0
      %999 = vmatprep.subr.bf16.mxu0 0
      %1000 = vmatpush1.bf16.msra.mxu0 0
      %1001 = vmatprep.subr.bf16.mxu0 0
      %1002 = vmatpush1.bf16.msra.mxu0 0
      %1003 = vmatprep.subr.bf16.mxu0 0
      %1004 = vmatpush1.bf16.msra.mxu0 0
      %1005 = vmatprep.subr.bf16.mxu0 0
      %1006 = vmatpush1.bf16.msra.mxu0 0
      %1007 = vmatprep.subr.bf16.mxu0 0
      %1008 = vmatpush1.bf16.msra.mxu0 0
      %1009 = vmatprep.subr.bf16.mxu0 0
      %1010 = vmatpush1.bf16.msra.mxu0 0
      %1011 = vmatprep.subr.bf16.mxu0 %v986
      %1012 = vmatpush1.bf16.msra.mxu0 %v985
      %1013 = vmatprep.subr.bf16.mxu0 0
      %1014 = vmatpush2.bf16.msra.mxu0 0
      %1015 = vmatprep.subr.bf16.mxu0 0
      %1016 = vmatpush2.bf16.msra.mxu0 0
      %1017 = vmatprep.subr.bf16.mxu0 0
      %1018 = vmatpush2.bf16.msra.mxu0 0
      %1019 = vmatprep.subr.bf16.mxu0 0
      %1020 = vmatpush2.bf16.msra.mxu0 0
      %1021 = vmatprep.subr.bf16.mxu0 0
      %1022 = vmatpush2.bf16.msra.mxu0 0
      %1023 = vmatprep.subr.bf16.mxu0 0
      %1024 = vmatpush2.bf16.msra.mxu0 0
      %1025 = vmatprep.subr.bf16.mxu0 0
      %1026 = vmatpush2.bf16.msra.mxu0 0
      %1027 = vmatprep.subr.bf16.mxu0 0
      %1028 = vmatpush2.bf16.msra.mxu0 0
      %1029 = vmatprep.mubr.bf16.mxu0 0
      %1030 = vmatmul.mubr.bf16.gmra.mxu0 %v992
      %v1031 = vpop.f32.mrf.mxu0
      %v1032 = vadd.f32 0.0, %v1031
      %v1033 = vpop.f32.mrf.mxu0
      %v1034 = vadd.f32 0.0, %v1033
      %v1035 = vpop.f32.mrf.mxu0
      %v1036 = vadd.f32 0.0, %v1035
      %v1037 = vpop.f32.mrf.mxu0
      %v1038 = vadd.f32 0.0, %v1037
      %1039 = vmatprep.mubr.bf16.mxu0 0
      %1040 = vmatmul.mubr.bf16.gmra.mxu0 %v995
      %v1041 = vpop.f32.mrf.mxu0
      %v1042 = vadd.f32 0.0, %v1041
      %v1043 = vpop.f32.mrf.mxu0
      %v1044 = vadd.f32 0.0, %v1043
      %v1045 = vpop.f32.mrf.mxu0
      %v1046 = vadd.f32 0.0, %v1045
      %v1047 = vpop.f32.mrf.mxu0
      %v1048 = vadd.f32 0.0, %v1047
      %1049 = vdwg.mxu0
      %1050 = vmatprep.subr.bf16.mxu0 0
      %1051 = vmatpush1.bf16.msra.mxu0 0
      %1052 = vmatprep.subr.bf16.mxu0 0
      %1053 = vmatpush1.bf16.msra.mxu0 0
      %1054 = vmatprep.subr.bf16.mxu0 0
      %1055 = vmatpush1.bf16.msra.mxu0 0
      %1056 = vmatprep.subr.bf16.mxu0 0
      %1057 = vmatpush1.bf16.msra.mxu0 0
      %1058 = vmatprep.subr.bf16.mxu0 0
      %1059 = vmatpush1.bf16.msra.mxu0 0
      %1060 = vmatprep.subr.bf16.mxu0 0
      %1061 = vmatpush1.bf16.msra.mxu0 0
      %1062 = vmatprep.subr.bf16.mxu0 0
      %1063 = vmatpush1.bf16.msra.mxu0 0
      %1064 = vmatprep.subr.bf16.mxu0 0
      %1065 = vmatpush1.bf16.msra.mxu0 %v987
      %1066 = vmatprep.subr.bf16.mxu0 0
      %1067 = vmatpush2.bf16.msra.mxu0 0
      %1068 = vmatprep.subr.bf16.mxu0 0
      %1069 = vmatpush2.bf16.msra.mxu0 0
      %1070 = vmatprep.subr.bf16.mxu0 0
      %1071 = vmatpush2.bf16.msra.mxu0 0
      %1072 = vmatprep.subr.bf16.mxu0 0
      %1073 = vmatpush2.bf16.msra.mxu0 0
      %1074 = vmatprep.subr.bf16.mxu0 0
      %1075 = vmatpush2.bf16.msra.mxu0 0
      %1076 = vmatprep.subr.bf16.mxu0 0
      %1077 = vmatpush2.bf16.msra.mxu0 0
      %1078 = vmatprep.subr.bf16.mxu0 0
      %1079 = vmatpush2.bf16.msra.mxu0 0
      %1080 = vmatprep.subr.bf16.mxu0 0
      %1081 = vmatpush2.bf16.msra.mxu0 0
      %1082 = vmatprep.mubr.bf16.mxu0 0
      %1083 = vmatmul.mubr.bf16.gmra.mxu0 %v992
      %v1084 = vpop.f32.mrf.mxu0
      %v1085 = vadd.f32 0.0, %v1084
      %v1086 = vpop.f32.mrf.mxu0
      %v1087 = vpop.f32.mrf.mxu0
      %v1088 = vadd.f32 0.0, %v1087
      %v1089 = vpop.f32.mrf.mxu0
      %1090 = vmatprep.mubr.bf16.mxu0 0
      %1091 = vmatmul.mubr.bf16.gmra.mxu0 %v995
      %v1092 = vpop.f32.mrf.mxu0
      %v1093 = vadd.f32 0.0, %v1092
      %v1094 = vpop.f32.mrf.mxu0
      %v1095 = vpop.f32.mrf.mxu0
      %v1096 = vadd.f32 0.0, %v1095
      %v1097 = vpop.f32.mrf.mxu0
      %1098 = vdwg.mxu0
      %v1099 = vadd.f32 %v949, %v1032
      %v1100 = vadd.f32 %v950, %v1034
      %v1101 = vadd.f32 %v951, %v1085
      %v1102 = vadd.f32 %v952, %v1036
      %v1103 = vadd.f32 %v953, %v1038
      %v1104 = vadd.f32 %v954, %v1088
      %v1105 = vadd.f32 %v955, %v1042
      %v1106 = vadd.f32 %v956, %v1044
      %v1107 = vadd.f32 %v957, %v1093
      %v1108 = vadd.f32 %v958, %v1046
      %v1109 = vadd.f32 %v959, %v1048
      %v1110 = vadd.f32 %v960, %v1096
      %s1111 = scalar_lea.vmem %s1, 96
      %v1112 = vld [vmem:[%s1111] sm:$0xf]
      %v1113 = vld [vmem:[%s1111 + $0x4] sm:$0xf]
      %v1114 = vld [vmem:[%s1111 + $0x8] sm:$0xf]
      %v1115 = vld [vmem:[%s1111 + $0xc] sm:$0xf]
      %v1120 = vunpack.c.l.b16 %v1112
      %v1121 = vunpack.c.l.b16 %v1113
      %v1122 = vunpack.c.l.b16 %v1114
      %v1123 = vunpack.c.l.b16 %v1115
      %v1124 = vpack.c.b16 %v1121, %v1120
      %v1125 = vpack.c.b16 %v1123, %v1122
      %1126 = vrot.lane.b32.xlu0 %v262, 92
      %v1127 = vpop.permute.xlu0 %1126
      %1128 = vrot.lane.b32.xlu0 %v263, 92
      %v1129 = vpop.permute.xlu0 %1128
      %1130 = vrot.lane.b32.xlu0 %v264, 92
      %v1131 = vpop.permute.xlu0 %1130
      %1132 = vrot.lane.b32.xlu0 %v265, 92
      %v1133 = vpop.permute.xlu0 %1132
      %vm1134 = vcmask 752640
      %v1135 = vsel %vm1134, %v1127, %v1129
      %v1136 = vsel %vm1134, %v1129, %v1131
      %v1137 = vsel %vm1134, %v1131, %v1133
      %v1142 = vsel %vm281, %v1124, 0
      %v1145 = vsel %vm281, %v1125, 0
      %1147 = vmatprep.subr.bf16.mxu0 0
      %1148 = vmatpush1.bf16.msra.mxu0 0
      %1149 = vmatprep.subr.bf16.mxu0 0
      %1150 = vmatpush1.bf16.msra.mxu0 0
      %1151 = vmatprep.subr.bf16.mxu0 0
      %1152 = vmatpush1.bf16.msra.mxu0 0
      %1153 = vmatprep.subr.bf16.mxu0 0
      %1154 = vmatpush1.bf16.msra.mxu0 0
      %1155 = vmatprep.subr.bf16.mxu0 0
      %1156 = vmatpush1.bf16.msra.mxu0 0
      %1157 = vmatprep.subr.bf16.mxu0 0
      %1158 = vmatpush1.bf16.msra.mxu0 0
      %1159 = vmatprep.subr.bf16.mxu0 0
      %1160 = vmatpush1.bf16.msra.mxu0 0
      %1161 = vmatprep.subr.bf16.mxu0 %v1136
      %1162 = vmatpush1.bf16.msra.mxu0 %v1135
      %1163 = vmatprep.subr.bf16.mxu0 0
      %1164 = vmatpush2.bf16.msra.mxu0 0
      %1165 = vmatprep.subr.bf16.mxu0 0
      %1166 = vmatpush2.bf16.msra.mxu0 0
      %1167 = vmatprep.subr.bf16.mxu0 0
      %1168 = vmatpush2.bf16.msra.mxu0 0
      %1169 = vmatprep.subr.bf16.mxu0 0
      %1170 = vmatpush2.bf16.msra.mxu0 0
      %1171 = vmatprep.subr.bf16.mxu0 0
      %1172 = vmatpush2.bf16.msra.mxu0 0
      %1173 = vmatprep.subr.bf16.mxu0 0
      %1174 = vmatpush2.bf16.msra.mxu0 0
      %1175 = vmatprep.subr.bf16.mxu0 0
      %1176 = vmatpush2.bf16.msra.mxu0 0
      %1177 = vmatprep.subr.bf16.mxu0 0
      %1178 = vmatpush2.bf16.msra.mxu0 0
      %1179 = vmatprep.mubr.bf16.mxu0 0
      %1180 = vmatmul.mubr.bf16.gmra.mxu0 %v1142
      %v1181 = vpop.f32.mrf.mxu0
      %v1182 = vadd.f32 0.0, %v1181
      %v1183 = vpop.f32.mrf.mxu0
      %v1184 = vadd.f32 0.0, %v1183
      %v1185 = vpop.f32.mrf.mxu0
      %v1186 = vadd.f32 0.0, %v1185
      %v1187 = vpop.f32.mrf.mxu0
      %v1188 = vadd.f32 0.0, %v1187
      %1189 = vmatprep.mubr.bf16.mxu0 0
      %1190 = vmatmul.mubr.bf16.gmra.mxu0 %v1145
      %v1191 = vpop.f32.mrf.mxu0
      %v1192 = vadd.f32 0.0, %v1191
      %v1193 = vpop.f32.mrf.mxu0
      %v1194 = vadd.f32 0.0, %v1193
      %v1195 = vpop.f32.mrf.mxu0
      %v1196 = vadd.f32 0.0, %v1195
      %v1197 = vpop.f32.mrf.mxu0
      %v1198 = vadd.f32 0.0, %v1197
      %1199 = vdwg.mxu0
      %1200 = vmatprep.subr.bf16.mxu0 0
      %1201 = vmatpush1.bf16.msra.mxu0 0
      %1202 = vmatprep.subr.bf16.mxu0 0
      %1203 = vmatpush1.bf16.msra.mxu0 0
      %1204 = vmatprep.subr.bf16.mxu0 0
      %1205 = vmatpush1.bf16.msra.mxu0 0
      %1206 = vmatprep.subr.bf16.mxu0 0
      %1207 = vmatpush1.bf16.msra.mxu0 0
      %1208 = vmatprep.subr.bf16.mxu0 0
      %1209 = vmatpush1.bf16.msra.mxu0 0
      %1210 = vmatprep.subr.bf16.mxu0 0
      %1211 = vmatpush1.bf16.msra.mxu0 0
      %1212 = vmatprep.subr.bf16.mxu0 0
      %1213 = vmatpush1.bf16.msra.mxu0 0
      %1214 = vmatprep.subr.bf16.mxu0 0
      %1215 = vmatpush1.bf16.msra.mxu0 %v1137
      %1216 = vmatprep.subr.bf16.mxu0 0
      %1217 = vmatpush2.bf16.msra.mxu0 0
      %1218 = vmatprep.subr.bf16.mxu0 0
      %1219 = vmatpush2.bf16.msra.mxu0 0
      %1220 = vmatprep.subr.bf16.mxu0 0
      %1221 = vmatpush2.bf16.msra.mxu0 0
      %1222 = vmatprep.subr.bf16.mxu0 0
      %1223 = vmatpush2.bf16.msra.mxu0 0
      %1224 = vmatprep.subr.bf16.mxu0 0
      %1225 = vmatpush2.bf16.msra.mxu0 0
      %1226 = vmatprep.subr.bf16.mxu0 0
      %1227 = vmatpush2.bf16.msra.mxu0 0
      %1228 = vmatprep.subr.bf16.mxu0 0
      %1229 = vmatpush2.bf16.msra.mxu0 0
      %1230 = vmatprep.subr.bf16.mxu0 0
      %1231 = vmatpush2.bf16.msra.mxu0 0
      %1232 = vmatprep.mubr.bf16.mxu0 0
      %1233 = vmatmul.mubr.bf16.gmra.mxu0 %v1142
      %v1234 = vpop.f32.mrf.mxu0
      %v1235 = vadd.f32 0.0, %v1234
      %v1236 = vpop.f32.mrf.mxu0
      %v1237 = vpop.f32.mrf.mxu0
      %v1238 = vadd.f32 0.0, %v1237
      %v1239 = vpop.f32.mrf.mxu0
      %1240 = vmatprep.mubr.bf16.mxu0 0
      %1241 = vmatmul.mubr.bf16.gmra.mxu0 %v1145
      %v1242 = vpop.f32.mrf.mxu0
      %v1243 = vadd.f32 0.0, %v1242
      %v1244 = vpop.f32.mrf.mxu0
      %v1245 = vpop.f32.mrf.mxu0
      %v1246 = vadd.f32 0.0, %v1245
      %v1247 = vpop.f32.mrf.mxu0
      %1248 = vdwg.mxu0
      %v1249 = vadd.f32 %v1099, %v1182
      %v1250 = vadd.f32 %v1100, %v1184
      %v1251 = vadd.f32 %v1101, %v1235
      %v1252 = vadd.f32 %v1102, %v1186
      %v1253 = vadd.f32 %v1103, %v1188
      %v1254 = vadd.f32 %v1104, %v1238
      %v1255 = vadd.f32 %v1105, %v1192
      %v1256 = vadd.f32 %v1106, %v1194
      %v1257 = vadd.f32 %v1107, %v1243
      %v1258 = vadd.f32 %v1108, %v1196
      %v1259 = vadd.f32 %v1109, %v1198
      %v1260 = vadd.f32 %v1110, %v1246
      %s1261 = scalar_lea.vmem %s1, 112
      %v1262 = vld [vmem:[%s1261] sm:$0xf]
      %v1263 = vld [vmem:[%s1261 + $0x4] sm:$0xf]
      %v1264 = vld [vmem:[%s1261 + $0x8] sm:$0xf]
      %v1265 = vld [vmem:[%s1261 + $0xc] sm:$0xf]
      %v1270 = vunpack.c.l.b16 %v1262
      %v1271 = vunpack.c.l.b16 %v1263
      %v1272 = vunpack.c.l.b16 %v1264
      %v1273 = vunpack.c.l.b16 %v1265
      %v1274 = vpack.c.b16 %v1271, %v1270
      %v1275 = vpack.c.b16 %v1273, %v1272
      %1276 = vrot.lane.b32.xlu0 %v262, 91
      %v1277 = vpop.permute.xlu0 %1276
      %1278 = vrot.lane.b32.xlu0 %v263, 91
      %v1279 = vpop.permute.xlu0 %1278
      %1280 = vrot.lane.b32.xlu0 %v264, 91
      %v1281 = vpop.permute.xlu0 %1280
      %1282 = vrot.lane.b32.xlu0 %v265, 91
      %v1283 = vpop.permute.xlu0 %1282
      %vm1284 = vcmask 744448
      %v1285 = vsel %vm1284, %v1277, %v1279
      %v1286 = vsel %vm1284, %v1279, %v1281
      %v1287 = vsel %vm1284, %v1281, %v1283
      %v1292 = vsel %vm281, %v1274, 0
      %v1295 = vsel %vm281, %v1275, 0
      %1297 = vmatprep.subr.bf16.mxu0 0
      %1298 = vmatpush1.bf16.msra.mxu0 0
      %1299 = vmatprep.subr.bf16.mxu0 0
      %1300 = vmatpush1.bf16.msra.mxu0 0
      %1301 = vmatprep.subr.bf16.mxu0 0
      %1302 = vmatpush1.bf16.msra.mxu0 0
      %1303 = vmatprep.subr.bf16.mxu0 0
      %1304 = vmatpush1.bf16.msra.mxu0 0
      %1305 = vmatprep.subr.bf16.mxu0 0
      %1306 = vmatpush1.bf16.msra.mxu0 0
      %1307 = vmatprep.subr.bf16.mxu0 0
      %1308 = vmatpush1.bf16.msra.mxu0 0
      %1309 = vmatprep.subr.bf16.mxu0 0
      %1310 = vmatpush1.bf16.msra.mxu0 0
      %1311 = vmatprep.subr.bf16.mxu0 %v1286
      %1312 = vmatpush1.bf16.msra.mxu0 %v1285
      %1313 = vmatprep.subr.bf16.mxu0 0
      %1314 = vmatpush2.bf16.msra.mxu0 0
      %1315 = vmatprep.subr.bf16.mxu0 0
      %1316 = vmatpush2.bf16.msra.mxu0 0
      %1317 = vmatprep.subr.bf16.mxu0 0
      %1318 = vmatpush2.bf16.msra.mxu0 0
      %1319 = vmatprep.subr.bf16.mxu0 0
      %1320 = vmatpush2.bf16.msra.mxu0 0
      %1321 = vmatprep.subr.bf16.mxu0 0
      %1322 = vmatpush2.bf16.msra.mxu0 0
      %1323 = vmatprep.subr.bf16.mxu0 0
      %1324 = vmatpush2.bf16.msra.mxu0 0
      %1325 = vmatprep.subr.bf16.mxu0 0
      %1326 = vmatpush2.bf16.msra.mxu0 0
      %1327 = vmatprep.subr.bf16.mxu0 0
      %1328 = vmatpush2.bf16.msra.mxu0 0
      %1329 = vmatprep.mubr.bf16.mxu0 0
      %1330 = vmatmul.mubr.bf16.gmra.mxu0 %v1292
      %v1331 = vpop.f32.mrf.mxu0
      %v1332 = vadd.f32 0.0, %v1331
      %v1333 = vpop.f32.mrf.mxu0
      %v1334 = vadd.f32 0.0, %v1333
      %v1335 = vpop.f32.mrf.mxu0
      %v1336 = vadd.f32 0.0, %v1335
      %v1337 = vpop.f32.mrf.mxu0
      %v1338 = vadd.f32 0.0, %v1337
      %1339 = vmatprep.mubr.bf16.mxu0 0
      %1340 = vmatmul.mubr.bf16.gmra.mxu0 %v1295
      %v1341 = vpop.f32.mrf.mxu0
      %v1342 = vadd.f32 0.0, %v1341
      %v1343 = vpop.f32.mrf.mxu0
      %v1344 = vadd.f32 0.0, %v1343
      %v1345 = vpop.f32.mrf.mxu0
      %v1346 = vadd.f32 0.0, %v1345
      %v1347 = vpop.f32.mrf.mxu0
      %v1348 = vadd.f32 0.0, %v1347
      %1349 = vdwg.mxu0
      %1350 = vmatprep.subr.bf16.mxu0 0
      %1351 = vmatpush1.bf16.msra.mxu0 0
      %1352 = vmatprep.subr.bf16.mxu0 0
      %1353 = vmatpush1.bf16.msra.mxu0 0
      %1354 = vmatprep.subr.bf16.mxu0 0
      %1355 = vmatpush1.bf16.msra.mxu0 0
      %1356 = vmatprep.subr.bf16.mxu0 0
      %1357 = vmatpush1.bf16.msra.mxu0 0
      %1358 = vmatprep.subr.bf16.mxu0 0
      %1359 = vmatpush1.bf16.msra.mxu0 0
      %1360 = vmatprep.subr.bf16.mxu0 0
      %1361 = vmatpush1.bf16.msra.mxu0 0
      %1362 = vmatprep.subr.bf16.mxu0 0
      %1363 = vmatpush1.bf16.msra.mxu0 0
      %1364 = vmatprep.subr.bf16.mxu0 0
      %1365 = vmatpush1.bf16.msra.mxu0 %v1287
      %1366 = vmatprep.subr.bf16.mxu0 0
      %1367 = vmatpush2.bf16.msra.mxu0 0
      %1368 = vmatprep.subr.bf16.mxu0 0
      %1369 = vmatpush2.bf16.msra.mxu0 0
      %1370 = vmatprep.subr.bf16.mxu0 0
      %1371 = vmatpush2.bf16.msra.mxu0 0
      %1372 = vmatprep.subr.bf16.mxu0 0
      %1373 = vmatpush2.bf16.msra.mxu0 0
      %1374 = vmatprep.subr.bf16.mxu0 0
      %1375 = vmatpush2.bf16.msra.mxu0 0
      %1376 = vmatprep.subr.bf16.mxu0 0
      %1377 = vmatpush2.bf16.msra.mxu0 0
      %1378 = vmatprep.subr.bf16.mxu0 0
      %1379 = vmatpush2.bf16.msra.mxu0 0
      %1380 = vmatprep.subr.bf16.mxu0 0
      %1381 = vmatpush2.bf16.msra.mxu0 0
      %1382 = vmatprep.mubr.bf16.mxu0 0
      %1383 = vmatmul.mubr.bf16.gmra.mxu0 %v1292
      %v1384 = vpop.f32.mrf.mxu0
      %v1385 = vadd.f32 0.0, %v1384
      %v1386 = vpop.f32.mrf.mxu0
      %v1387 = vpop.f32.mrf.mxu0
      %v1388 = vadd.f32 0.0, %v1387
      %v1389 = vpop.f32.mrf.mxu0
      %1390 = vmatprep.mubr.bf16.mxu0 0
      %1391 = vmatmul.mubr.bf16.gmra.mxu0 %v1295
      %v1392 = vpop.f32.mrf.mxu0
      %v1393 = vadd.f32 0.0, %v1392
      %v1394 = vpop.f32.mrf.mxu0
      %v1395 = vpop.f32.mrf.mxu0
      %v1396 = vadd.f32 0.0, %v1395
      %v1397 = vpop.f32.mrf.mxu0
      %1398 = vdwg.mxu0
      %v1399 = vadd.f32 %v1249, %v1332
      %v1400 = vadd.f32 %v1250, %v1334
      %v1401 = vadd.f32 %v1251, %v1385
      %v1402 = vadd.f32 %v1252, %v1336
      %v1403 = vadd.f32 %v1253, %v1338
      %v1404 = vadd.f32 %v1254, %v1388
      %v1405 = vadd.f32 %v1255, %v1342
      %v1406 = vadd.f32 %v1256, %v1344
      %v1407 = vadd.f32 %v1257, %v1393
      %v1408 = vadd.f32 %v1258, %v1346
      %v1409 = vadd.f32 %v1259, %v1348
      %v1410 = vadd.f32 %v1260, %v1396
      %s1411 = scalar_lea.vmem %s1, 128
      %v1412 = vld [vmem:[%s1411] sm:$0xf]
      %v1413 = vld [vmem:[%s1411 + $0x4] sm:$0xf]
      %v1414 = vld [vmem:[%s1411 + $0x8] sm:$0xf]
      %v1415 = vld [vmem:[%s1411 + $0xc] sm:$0xf]
      %v1420 = vunpack.c.l.b16 %v1412
      %v1421 = vunpack.c.l.b16 %v1413
      %v1422 = vunpack.c.l.b16 %v1414
      %v1423 = vunpack.c.l.b16 %v1415
      %v1424 = vpack.c.b16 %v1421, %v1420
      %v1425 = vpack.c.b16 %v1423, %v1422
      %1426 = vrot.lane.b32.xlu0 %v262, 90
      %v1427 = vpop.permute.xlu0 %1426
      %1428 = vrot.lane.b32.xlu0 %v263, 90
      %v1429 = vpop.permute.xlu0 %1428
      %1430 = vrot.lane.b32.xlu0 %v264, 90
      %v1431 = vpop.permute.xlu0 %1430
      %1432 = vrot.lane.b32.xlu0 %v265, 90
      %v1433 = vpop.permute.xlu0 %1432
      %vm1434 = vcmask 736256
      %v1435 = vsel %vm1434, %v1427, %v1429
      %v1436 = vsel %vm1434, %v1429, %v1431
      %v1437 = vsel %vm1434, %v1431, %v1433
      %v1442 = vsel %vm281, %v1424, 0
      %v1445 = vsel %vm281, %v1425, 0
      %1447 = vmatprep.subr.bf16.mxu0 0
      %1448 = vmatpush1.bf16.msra.mxu0 0
      %1449 = vmatprep.subr.bf16.mxu0 0
      %1450 = vmatpush1.bf16.msra.mxu0 0
      %1451 = vmatprep.subr.bf16.mxu0 0
      %1452 = vmatpush1.bf16.msra.mxu0 0
      %1453 = vmatprep.subr.bf16.mxu0 0
      %1454 = vmatpush1.bf16.msra.mxu0 0
      %1455 = vmatprep.subr.bf16.mxu0 0
      %1456 = vmatpush1.bf16.msra.mxu0 0
      %1457 = vmatprep.subr.bf16.mxu0 0
      %1458 = vmatpush1.bf16.msra.mxu0 0
      %1459 = vmatprep.subr.bf16.mxu0 0
      %1460 = vmatpush1.bf16.msra.mxu0 0
      %1461 = vmatprep.subr.bf16.mxu0 %v1436
      %1462 = vmatpush1.bf16.msra.mxu0 %v1435
      %1463 = vmatprep.subr.bf16.mxu0 0
      %1464 = vmatpush2.bf16.msra.mxu0 0
      %1465 = vmatprep.subr.bf16.mxu0 0
      %1466 = vmatpush2.bf16.msra.mxu0 0
      %1467 = vmatprep.subr.bf16.mxu0 0
      %1468 = vmatpush2.bf16.msra.mxu0 0
      %1469 = vmatprep.subr.bf16.mxu0 0
      %1470 = vmatpush2.bf16.msra.mxu0 0
      %1471 = vmatprep.subr.bf16.mxu0 0
      %1472 = vmatpush2.bf16.msra.mxu0 0
      %1473 = vmatprep.subr.bf16.mxu0 0
      %1474 = vmatpush2.bf16.msra.mxu0 0
      %1475 = vmatprep.subr.bf16.mxu0 0
      %1476 = vmatpush2.bf16.msra.mxu0 0
      %1477 = vmatprep.subr.bf16.mxu0 0
      %1478 = vmatpush2.bf16.msra.mxu0 0
      %1479 = vmatprep.mubr.bf16.mxu0 0
      %1480 = vmatmul.mubr.bf16.gmra.mxu0 %v1442
      %v1481 = vpop.f32.mrf.mxu0
      %v1482 = vadd.f32 0.0, %v1481
      %v1483 = vpop.f32.mrf.mxu0
      %v1484 = vadd.f32 0.0, %v1483
      %v1485 = vpop.f32.mrf.mxu0
      %v1486 = vadd.f32 0.0, %v1485
      %v1487 = vpop.f32.mrf.mxu0
      %v1488 = vadd.f32 0.0, %v1487
      %1489 = vmatprep.mubr.bf16.mxu0 0
      %1490 = vmatmul.mubr.bf16.gmra.mxu0 %v1445
      %v1491 = vpop.f32.mrf.mxu0
      %v1492 = vadd.f32 0.0, %v1491
      %v1493 = vpop.f32.mrf.mxu0
      %v1494 = vadd.f32 0.0, %v1493
      %v1495 = vpop.f32.mrf.mxu0
      %v1496 = vadd.f32 0.0, %v1495
      %v1497 = vpop.f32.mrf.mxu0
      %v1498 = vadd.f32 0.0, %v1497
      %1499 = vdwg.mxu0
      %1500 = vmatprep.subr.bf16.mxu0 0
      %1501 = vmatpush1.bf16.msra.mxu0 0
      %1502 = vmatprep.subr.bf16.mxu0 0
      %1503 = vmatpush1.bf16.msra.mxu0 0
      %1504 = vmatprep.subr.bf16.mxu0 0
      %1505 = vmatpush1.bf16.msra.mxu0 0
      %1506 = vmatprep.subr.bf16.mxu0 0
      %1507 = vmatpush1.bf16.msra.mxu0 0
      %1508 = vmatprep.subr.bf16.mxu0 0
      %1509 = vmatpush1.bf16.msra.mxu0 0
      %1510 = vmatprep.subr.bf16.mxu0 0
      %1511 = vmatpush1.bf16.msra.mxu0 0
      %1512 = vmatprep.subr.bf16.mxu0 0
      %1513 = vmatpush1.bf16.msra.mxu0 0
      %1514 = vmatprep.subr.bf16.mxu0 0
      %1515 = vmatpush1.bf16.msra.mxu0 %v1437
      %1516 = vmatprep.subr.bf16.mxu0 0
      %1517 = vmatpush2.bf16.msra.mxu0 0
      %1518 = vmatprep.subr.bf16.mxu0 0
      %1519 = vmatpush2.bf16.msra.mxu0 0
      %1520 = vmatprep.subr.bf16.mxu0 0
      %1521 = vmatpush2.bf16.msra.mxu0 0
      %1522 = vmatprep.subr.bf16.mxu0 0
      %1523 = vmatpush2.bf16.msra.mxu0 0
      %1524 = vmatprep.subr.bf16.mxu0 0
      %1525 = vmatpush2.bf16.msra.mxu0 0
      %1526 = vmatprep.subr.bf16.mxu0 0
      %1527 = vmatpush2.bf16.msra.mxu0 0
      %1528 = vmatprep.subr.bf16.mxu0 0
      %1529 = vmatpush2.bf16.msra.mxu0 0
      %1530 = vmatprep.subr.bf16.mxu0 0
      %1531 = vmatpush2.bf16.msra.mxu0 0
      %1532 = vmatprep.mubr.bf16.mxu0 0
      %1533 = vmatmul.mubr.bf16.gmra.mxu0 %v1442
      %v1534 = vpop.f32.mrf.mxu0
      %v1535 = vadd.f32 0.0, %v1534
      %v1536 = vpop.f32.mrf.mxu0
      %v1537 = vpop.f32.mrf.mxu0
      %v1538 = vadd.f32 0.0, %v1537
      %v1539 = vpop.f32.mrf.mxu0
      %1540 = vmatprep.mubr.bf16.mxu0 0
      %1541 = vmatmul.mubr.bf16.gmra.mxu0 %v1445
      %v1542 = vpop.f32.mrf.mxu0
      %v1543 = vadd.f32 0.0, %v1542
      %v1544 = vpop.f32.mrf.mxu0
      %v1545 = vpop.f32.mrf.mxu0
      %v1546 = vadd.f32 0.0, %v1545
      %v1547 = vpop.f32.mrf.mxu0
      %1548 = vdwg.mxu0
      %v1549 = vadd.f32 %v1399, %v1482
      %v1550 = vadd.f32 %v1400, %v1484
      %v1551 = vadd.f32 %v1401, %v1535
      %v1552 = vadd.f32 %v1402, %v1486
      %v1553 = vadd.f32 %v1403, %v1488
      %v1554 = vadd.f32 %v1404, %v1538
      %v1555 = vadd.f32 %v1405, %v1492
      %v1556 = vadd.f32 %v1406, %v1494
      %v1557 = vadd.f32 %v1407, %v1543
      %v1558 = vadd.f32 %v1408, %v1496
      %v1559 = vadd.f32 %v1409, %v1498
      %v1560 = vadd.f32 %v1410, %v1546
      %v1561 = vld [vmem:[%s2] sm:$0xff]
      %v1562 = vld [vmem:[%s2 + $0x8] sm:$0xff]
      %v1563 = vld [vmem:[%s2 + $0x10] sm:$0xff]
      %v1564 = vld [vmem:[%s2 + $0x18] sm:$0xff]
      %v1565 = vmul.f32 %v1549, %v1549
      %v1566 = vmul.f32 %v1550, %v1550
      %v1567 = vmul.f32 %v1551, %v1551
      %v1568 = vmul.f32 %v1552, %v1552
      %v1569 = vmul.f32 %v1553, %v1553
      %v1570 = vmul.f32 %v1554, %v1554
      %v1571 = vmul.f32 %v1555, %v1555
      %v1572 = vmul.f32 %v1556, %v1556
      %v1573 = vmul.f32 %v1557, %v1557
      %v1574 = vmul.f32 %v1558, %v1558
      %v1575 = vmul.f32 %v1559, %v1559
      %v1576 = vmul.f32 %v1560, %v1560
      %v1577 = vld [vmem:[%s3] sm:$0xff]
      %v1578 = vld [vmem:[%s3 + $0x8] sm:$0xff]
      %v1579 = vld [vmem:[%s3 + $0x10] sm:$0xff]
      %v1580 = vld [vmem:[%s3 + $0x18] sm:$0xff]
      %1582 = vset.pattern.permute.xlu0 0
      %1583 = vperm.xlu0 %1582, %v1577
      %v1584 = vpop.permute.xlu0 %1583
      %1587 = vset.pattern.permute.xlu0 0
      %1588 = vperm.xlu0 %1587, %v1578
      %v1589 = vpop.permute.xlu0 %1588
      %1592 = vset.pattern.permute.xlu0 0
      %1593 = vperm.xlu0 %1592, %v1579
      %v1594 = vpop.permute.xlu0 %1593
      %1597 = vset.pattern.permute.xlu0 0
      %1598 = vperm.xlu0 %1597, %v1580
      %v1599 = vpop.permute.xlu0 %1598
      %vm1601 = vcmask 261120
      %v1603 = vsel %vm1601, %v1561, 0
      %v1606 = vsel %vm1601, %v1562, 0
      %v1609 = vsel %vm1601, %v1563, 0
      %v1612 = vsel %vm1601, %v1564, 0
      %1614 = vmatprep.subr.mxu0 0.0
      %1615 = vmatpush1.msra.mxu0 0.0
      %1616 = vmatprep.subr.mxu0 0.0
      %1617 = vmatpush1.msra.mxu0 0.0
      %1618 = vmatprep.subr.mxu0 0.0
      %1619 = vmatpush1.msra.mxu0 0.0
      %1620 = vmatprep.subr.mxu0 0.0
      %1621 = vmatpush1.msra.mxu0 0.0
      %1622 = vmatprep.subr.mxu0 0.0
      %1623 = vmatpush1.msra.mxu0 0.0
      %1624 = vmatprep.subr.mxu0 0.0
      %1625 = vmatpush1.msra.mxu0 0.0
      %1626 = vmatprep.subr.mxu0 0.0
      %1627 = vmatpush1.msra.mxu0 0.0
      %1628 = vmatprep.subr.mxu0 0.0
      %1629 = vmatpush1.msra.mxu0 0.0
      %1630 = vmatprep.subr.mxu0 0.0
      %1631 = vmatpush1.msra.mxu0 0.0
      %1632 = vmatprep.subr.mxu0 0.0
      %1633 = vmatpush1.msra.mxu0 0.0
      %1634 = vmatprep.subr.mxu0 0.0
      %1635 = vmatpush1.msra.mxu0 0.0
      %1636 = vmatprep.subr.mxu0 0.0
      %1637 = vmatpush1.msra.mxu0 0.0
      %1638 = vmatprep.subr.mxu0 %v1575
      %1639 = vmatpush1.msra.mxu0 %v1574
      %1640 = vmatprep.subr.mxu0 %v1572
      %1641 = vmatpush1.msra.mxu0 %v1571
      %1642 = vmatprep.subr.mxu0 %v1569
      %1643 = vmatpush1.msra.mxu0 %v1568
      %1644 = vmatprep.subr.mxu0 %v1566
      %1645 = vmatpush1.msra.mxu0 %v1565
      %1646 = vmatprep.subr.mxu0 0.0
      %1647 = vmatpush2.msra.mxu0 0.0
      %1648 = vmatprep.subr.mxu0 0.0
      %1649 = vmatpush2.msra.mxu0 0.0
      %1650 = vmatprep.subr.mxu0 0.0
      %1651 = vmatpush2.msra.mxu0 0.0
      %1652 = vmatprep.subr.mxu0 0.0
      %1653 = vmatpush2.msra.mxu0 0.0
      %1654 = vmatprep.subr.mxu0 0.0
      %1655 = vmatpush2.msra.mxu0 0.0
      %1656 = vmatprep.subr.mxu0 0.0
      %1657 = vmatpush2.msra.mxu0 0.0
      %1658 = vmatprep.subr.mxu0 0.0
      %1659 = vmatpush2.msra.mxu0 0.0
      %1660 = vmatprep.subr.mxu0 0.0
      %1661 = vmatpush2.msra.mxu0 0.0
      %1662 = vmatprep.subr.mxu0 0.0
      %1663 = vmatpush2.msra.mxu0 0.0
      %1664 = vmatprep.subr.mxu0 0.0
      %1665 = vmatpush2.msra.mxu0 0.0
      %1666 = vmatprep.subr.mxu0 0.0
      %1667 = vmatpush2.msra.mxu0 0.0
      %1668 = vmatprep.subr.mxu0 0.0
      %1669 = vmatpush2.msra.mxu0 0.0
      %1670 = vmatprep.subr.mxu0 0.0
      %1671 = vmatpush2.msra.mxu0 0.0
      %1672 = vmatprep.subr.mxu0 0.0
      %1673 = vmatpush2.msra.mxu0 0.0
      %1674 = vmatprep.subr.mxu0 0.0
      %1675 = vmatpush2.msra.mxu0 0.0
      %1676 = vmatprep.subr.mxu0 0.0
      %1677 = vmatpush2.msra.mxu0 0.0
      %1678 = vmatprep.mubr.f32.mxu0 0.0
      %1679 = vmatmul.mubr.f32.gmra.mxu0 %v1603
      %v1680 = vpop.f32.mrf.mxu0
      %v1681 = vadd.f32 %v1584, %v1680
      %v1682 = vpop.f32.mrf.mxu0
      %v1683 = vadd.f32 %v1584, %v1682
      %1684 = vmatprep.mubr.f32.mxu0 0.0
      %1685 = vmatmul.mubr.f32.gmra.mxu0 %v1606
      %v1686 = vpop.f32.mrf.mxu0
      %v1687 = vadd.f32 %v1589, %v1686
      %v1688 = vpop.f32.mrf.mxu0
      %v1689 = vadd.f32 %v1589, %v1688
      %1690 = vmatprep.mubr.f32.mxu0 0.0
      %1691 = vmatmul.mubr.f32.gmra.mxu0 %v1609
      %v1692 = vpop.f32.mrf.mxu0
      %v1693 = vadd.f32 %v1594, %v1692
      %v1694 = vpop.f32.mrf.mxu0
      %v1695 = vadd.f32 %v1594, %v1694
      %1696 = vmatprep.mubr.f32.mxu0 0.0
      %1697 = vmatmul.mubr.f32.gmra.mxu0 %v1612
      %v1698 = vpop.f32.mrf.mxu0
      %v1699 = vadd.f32 %v1599, %v1698
      %v1700 = vpop.f32.mrf.mxu0
      %v1701 = vadd.f32 %v1599, %v1700
      %1702 = vdwg.mxu0
      %1703 = vmatprep.subr.mxu0 0.0
      %1704 = vmatpush1.msra.mxu0 0.0
      %1705 = vmatprep.subr.mxu0 0.0
      %1706 = vmatpush1.msra.mxu0 0.0
      %1707 = vmatprep.subr.mxu0 0.0
      %1708 = vmatpush1.msra.mxu0 0.0
      %1709 = vmatprep.subr.mxu0 0.0
      %1710 = vmatpush1.msra.mxu0 0.0
      %1711 = vmatprep.subr.mxu0 0.0
      %1712 = vmatpush1.msra.mxu0 0.0
      %1713 = vmatprep.subr.mxu0 0.0
      %1714 = vmatpush1.msra.mxu0 0.0
      %1715 = vmatprep.subr.mxu0 0.0
      %1716 = vmatpush1.msra.mxu0 0.0
      %1717 = vmatprep.subr.mxu0 0.0
      %1718 = vmatpush1.msra.mxu0 0.0
      %1719 = vmatprep.subr.mxu0 0.0
      %1720 = vmatpush1.msra.mxu0 0.0
      %1721 = vmatprep.subr.mxu0 0.0
      %1722 = vmatpush1.msra.mxu0 0.0
      %1723 = vmatprep.subr.mxu0 0.0
      %1724 = vmatpush1.msra.mxu0 0.0
      %1725 = vmatprep.subr.mxu0 0.0
      %1726 = vmatpush1.msra.mxu0 0.0
      %1727 = vmatprep.subr.mxu0 0.0
      %1728 = vmatpush1.msra.mxu0 %v1576
      %1729 = vmatprep.subr.mxu0 0.0
      %1730 = vmatpush1.msra.mxu0 %v1573
      %1731 = vmatprep.subr.mxu0 0.0
      %1732 = vmatpush1.msra.mxu0 %v1570
      %1733 = vmatprep.subr.mxu0 0.0
      %1734 = vmatpush1.msra.mxu0 %v1567
      %1735 = vmatprep.subr.mxu0 0.0
      %1736 = vmatpush2.msra.mxu0 0.0
      %1737 = vmatprep.subr.mxu0 0.0
      %1738 = vmatpush2.msra.mxu0 0.0
      %1739 = vmatprep.subr.mxu0 0.0
      %1740 = vmatpush2.msra.mxu0 0.0
      %1741 = vmatprep.subr.mxu0 0.0
      %1742 = vmatpush2.msra.mxu0 0.0
      %1743 = vmatprep.subr.mxu0 0.0
      %1744 = vmatpush2.msra.mxu0 0.0
      %1745 = vmatprep.subr.mxu0 0.0
      %1746 = vmatpush2.msra.mxu0 0.0
      %1747 = vmatprep.subr.mxu0 0.0
      %1748 = vmatpush2.msra.mxu0 0.0
      %1749 = vmatprep.subr.mxu0 0.0
      %1750 = vmatpush2.msra.mxu0 0.0
      %1751 = vmatprep.subr.mxu0 0.0
      %1752 = vmatpush2.msra.mxu0 0.0
      %1753 = vmatprep.subr.mxu0 0.0
      %1754 = vmatpush2.msra.mxu0 0.0
      %1755 = vmatprep.subr.mxu0 0.0
      %1756 = vmatpush2.msra.mxu0 0.0
      %1757 = vmatprep.subr.mxu0 0.0
      %1758 = vmatpush2.msra.mxu0 0.0
      %1759 = vmatprep.subr.mxu0 0.0
      %1760 = vmatpush2.msra.mxu0 0.0
      %1761 = vmatprep.subr.mxu0 0.0
      %1762 = vmatpush2.msra.mxu0 0.0
      %1763 = vmatprep.subr.mxu0 0.0
      %1764 = vmatpush2.msra.mxu0 0.0
      %1765 = vmatprep.subr.mxu0 0.0
      %1766 = vmatpush2.msra.mxu0 0.0
      %1767 = vmatprep.mubr.f32.mxu0 0.0
      %1768 = vmatmul.mubr.f32.gmra.mxu0 %v1603
      %v1769 = vpop.f32.mrf.mxu0
      %v1770 = vadd.f32 %v1584, %v1769
      %v1771 = vpop.f32.mrf.mxu0
      %1772 = vmatprep.mubr.f32.mxu0 0.0
      %1773 = vmatmul.mubr.f32.gmra.mxu0 %v1606
      %v1774 = vpop.f32.mrf.mxu0
      %v1775 = vadd.f32 %v1589, %v1774
      %v1776 = vpop.f32.mrf.mxu0
      %1777 = vmatprep.mubr.f32.mxu0 0.0
      %1778 = vmatmul.mubr.f32.gmra.mxu0 %v1609
      %v1779 = vpop.f32.mrf.mxu0
      %v1780 = vadd.f32 %v1594, %v1779
      %v1781 = vpop.f32.mrf.mxu0
      %1782 = vmatprep.mubr.f32.mxu0 0.0
      %1783 = vmatmul.mubr.f32.gmra.mxu0 %v1612
      %v1784 = vpop.f32.mrf.mxu0
      %v1785 = vadd.f32 %v1599, %v1784
      %v1786 = vpop.f32.mrf.mxu0
      %1787 = vdwg.mxu0
      %v1788 = vmax.f32 %v1681, 0.0
      %v1789 = vmax.f32 %v1683, 0.0
      %v1790 = vmax.f32 %v1770, 0.0
      %v1791 = vmax.f32 %v1687, 0.0
      %v1792 = vmax.f32 %v1689, 0.0
      %v1793 = vmax.f32 %v1775, 0.0
      %v1794 = vmax.f32 %v1693, 0.0
      %v1795 = vmax.f32 %v1695, 0.0
      %v1796 = vmax.f32 %v1780, 0.0
      %v1797 = vmax.f32 %v1699, 0.0
      %v1798 = vmax.f32 %v1701, 0.0
      %v1799 = vmax.f32 %v1785, 0.0
      %v1800 = vrsqrt.pop %v1788
      %v1801 = vmul.f32 %v1788, %v1800
      %vm1802 = vcmp.eq.f32.partialorder %v1788, inf
      %v1803 = vsel %vm1802, %v1788, %v1801
      %vm1804 = vcmp.eq.f32.partialorder %v1788, 0.0
      %v1805 = vand.u32 %v1788, 2147483648
      %v1806 = vsel %vm1804, %v1805, %v1803
      %v1807 = vrsqrt.pop %v1789
      %v1808 = vmul.f32 %v1789, %v1807
      %vm1809 = vcmp.eq.f32.partialorder %v1789, inf
      %v1810 = vsel %vm1809, %v1789, %v1808
      %vm1811 = vcmp.eq.f32.partialorder %v1789, 0.0
      %v1812 = vand.u32 %v1789, 2147483648
      %v1813 = vsel %vm1811, %v1812, %v1810
      %v1814 = vrsqrt.pop %v1790
      %v1815 = vmul.f32 %v1790, %v1814
      %vm1816 = vcmp.eq.f32.partialorder %v1790, inf
      %v1817 = vsel %vm1816, %v1790, %v1815
      %vm1818 = vcmp.eq.f32.partialorder %v1790, 0.0
      %v1819 = vand.u32 %v1790, 2147483648
      %v1820 = vsel %vm1818, %v1819, %v1817
      %v1821 = vrsqrt.pop %v1791
      %v1822 = vmul.f32 %v1791, %v1821
      %vm1823 = vcmp.eq.f32.partialorder %v1791, inf
      %v1824 = vsel %vm1823, %v1791, %v1822
      %vm1825 = vcmp.eq.f32.partialorder %v1791, 0.0
      %v1826 = vand.u32 %v1791, 2147483648
      %v1827 = vsel %vm1825, %v1826, %v1824
      %v1828 = vrsqrt.pop %v1792
      %v1829 = vmul.f32 %v1792, %v1828
      %vm1830 = vcmp.eq.f32.partialorder %v1792, inf
      %v1831 = vsel %vm1830, %v1792, %v1829
      %vm1832 = vcmp.eq.f32.partialorder %v1792, 0.0
      %v1833 = vand.u32 %v1792, 2147483648
      %v1834 = vsel %vm1832, %v1833, %v1831
      %v1835 = vrsqrt.pop %v1793
      %v1836 = vmul.f32 %v1793, %v1835
      %vm1837 = vcmp.eq.f32.partialorder %v1793, inf
      %v1838 = vsel %vm1837, %v1793, %v1836
      %vm1839 = vcmp.eq.f32.partialorder %v1793, 0.0
      %v1840 = vand.u32 %v1793, 2147483648
      %v1841 = vsel %vm1839, %v1840, %v1838
      %v1842 = vrsqrt.pop %v1794
      %v1843 = vmul.f32 %v1794, %v1842
      %vm1844 = vcmp.eq.f32.partialorder %v1794, inf
      %v1845 = vsel %vm1844, %v1794, %v1843
      %vm1846 = vcmp.eq.f32.partialorder %v1794, 0.0
      %v1847 = vand.u32 %v1794, 2147483648
      %v1848 = vsel %vm1846, %v1847, %v1845
      %v1849 = vrsqrt.pop %v1795
      %v1850 = vmul.f32 %v1795, %v1849
      %vm1851 = vcmp.eq.f32.partialorder %v1795, inf
      %v1852 = vsel %vm1851, %v1795, %v1850
      %vm1853 = vcmp.eq.f32.partialorder %v1795, 0.0
      %v1854 = vand.u32 %v1795, 2147483648
      %v1855 = vsel %vm1853, %v1854, %v1852
      %v1856 = vrsqrt.pop %v1796
      %v1857 = vmul.f32 %v1796, %v1856
      %vm1858 = vcmp.eq.f32.partialorder %v1796, inf
      %v1859 = vsel %vm1858, %v1796, %v1857
      %vm1860 = vcmp.eq.f32.partialorder %v1796, 0.0
      %v1861 = vand.u32 %v1796, 2147483648
      %v1862 = vsel %vm1860, %v1861, %v1859
      %v1863 = vrsqrt.pop %v1797
      %v1864 = vmul.f32 %v1797, %v1863
      %vm1865 = vcmp.eq.f32.partialorder %v1797, inf
      %v1866 = vsel %vm1865, %v1797, %v1864
      %vm1867 = vcmp.eq.f32.partialorder %v1797, 0.0
      %v1868 = vand.u32 %v1797, 2147483648
      %v1869 = vsel %vm1867, %v1868, %v1866
      %v1870 = vrsqrt.pop %v1798
      %v1871 = vmul.f32 %v1798, %v1870
      %vm1872 = vcmp.eq.f32.partialorder %v1798, inf
      %v1873 = vsel %vm1872, %v1798, %v1871
      %vm1874 = vcmp.eq.f32.partialorder %v1798, 0.0
      %v1875 = vand.u32 %v1798, 2147483648
      %v1876 = vsel %vm1874, %v1875, %v1873
      %v1877 = vrsqrt.pop %v1799
      %v1878 = vmul.f32 %v1799, %v1877
      %vm1879 = vcmp.eq.f32.partialorder %v1799, inf
      %v1880 = vsel %vm1879, %v1799, %v1878
      %vm1881 = vcmp.eq.f32.partialorder %v1799, 0.0
      %v1882 = vand.u32 %v1799, 2147483648
      %v1883 = vsel %vm1881, %v1882, %v1880
      %v1884 = vmul.f32 %v1549, %v1806
      %v1885 = vmul.f32 %v1550, %v1813
      %v1886 = vmul.f32 %v1551, %v1820
      %v1887 = vmul.f32 %v1552, %v1827
      %v1888 = vmul.f32 %v1553, %v1834
      %v1889 = vmul.f32 %v1554, %v1841
      %v1890 = vmul.f32 %v1555, %v1848
      %v1891 = vmul.f32 %v1556, %v1855
      %v1892 = vmul.f32 %v1557, %v1862
      %v1893 = vmul.f32 %v1558, %v1869
      %v1894 = vmul.f32 %v1559, %v1876
      %v1895 = vmul.f32 %v1560, %v1883
      %s1896 = sld [smem:[#allocation2]]
      %vm1897 = vcmp.ge.f32.partialorder %v1884, 0.0
      %vm1898 = vcmp.ge.f32.partialorder %v1885, 0.0
      %vm1899 = vcmp.ge.f32.partialorder %v1886, 0.0
      %vm1900 = vcmp.ge.f32.partialorder %v1887, 0.0
      %vm1901 = vcmp.ge.f32.partialorder %v1888, 0.0
      %vm1902 = vcmp.ge.f32.partialorder %v1889, 0.0
      %vm1903 = vcmp.ge.f32.partialorder %v1890, 0.0
      %vm1904 = vcmp.ge.f32.partialorder %v1891, 0.0
      %vm1905 = vcmp.ge.f32.partialorder %v1892, 0.0
      %vm1906 = vcmp.ge.f32.partialorder %v1893, 0.0
      %vm1907 = vcmp.ge.f32.partialorder %v1894, 0.0
      %vm1908 = vcmp.ge.f32.partialorder %v1895, 0.0
      %v1909 = vstv %s1896
      %v1910 = vmul.f32 %v1909, %v1884
      %v1911 = vmul.f32 %v1909, %v1885
      %v1912 = vmul.f32 %v1909, %v1886
      %v1913 = vmul.f32 %v1909, %v1887
      %v1914 = vmul.f32 %v1909, %v1888
      %v1915 = vmul.f32 %v1909, %v1889
      %v1916 = vmul.f32 %v1909, %v1890
      %v1917 = vmul.f32 %v1909, %v1891
      %v1918 = vmul.f32 %v1909, %v1892
      %v1919 = vmul.f32 %v1909, %v1893
      %v1920 = vmul.f32 %v1909, %v1894
      %v1921 = vmul.f32 %v1909, %v1895
      %v1922 = vsel %vm1897, %v1884, %v1910
      %v1923 = vsel %vm1898, %v1885, %v1911
      %v1924 = vsel %vm1899, %v1886, %v1912
      %v1925 = vsel %vm1900, %v1887, %v1913
      %v1926 = vsel %vm1901, %v1888, %v1914
      %v1927 = vsel %vm1902, %v1889, %v1915
      %v1928 = vsel %vm1903, %v1890, %v1916
      %v1929 = vsel %vm1904, %v1891, %v1917
      %v1930 = vsel %vm1905, %v1892, %v1918
      %v1931 = vsel %vm1906, %v1893, %v1919
      %v1932 = vsel %vm1907, %v1894, %v1920
      %v1933 = vsel %vm1908, %v1895, %v1921
      %1934 = vst [vmem:[%s225] sm:$0xff] %v1922
      %1935 = vst [vmem:[%s225 + $0x8] sm:$0xff] %v1923
      %1936 = vst [vmem:[%s225 + $0x10] sm:$0xff] %v1924
      %1937 = vst [vmem:[%s225 + $0x18] sm:$0xff] %v1925
      %1938 = vst [vmem:[%s225 + $0x20] sm:$0xff] %v1926
      %1939 = vst [vmem:[%s225 + $0x28] sm:$0xff] %v1927
      %1940 = vst [vmem:[%s225 + $0x30] sm:$0xff] %v1928
      %1941 = vst [vmem:[%s225 + $0x38] sm:$0xff] %v1929
      %1942 = vst [vmem:[%s225 + $0x40] sm:$0xff] %v1930
      %1943 = vst [vmem:[%s225 + $0x48] sm:$0xff] %v1931
      %1944 = vst [vmem:[%s225 + $0x50] sm:$0xff] %v1932
      %1945 = vst [vmem:[%s225 + $0x58] sm:$0xff] %v1933
      %p1946 = scmp.lt.s32.totalorder %s17, 1
      %s1947 = scalar_select %p1946, %s17, 1
      %s1948 = smul.addr %s1947, 12
      %s1949 = smul.addr %s1948, 8
      %s1950 = scalar_lea.vmem %s5, %s1949
      // Predicated region
      $region41: #{deconv_block_pallas.1} parent=39 // pred_check
        %p1951 = pneg %p145
      $region42: #{deconv_block_pallas.1} parent=39 // pred_check_branch
        %1953 = sbr.rel (%p1951) target = $region44
      $region43: #{deconv_block_pallas.1} parent=39 // pred_region
        _
      $region44: #{deconv_block_pallas.1} parent=39 // pred_fallthru
        _
    $region40: #{deconv_block_pallas.1} parent=5 // pred_fallthru
      _
    %p1954 = scmp.le.s32.totalorder 2, %s12
    // Predicated region
    $region45: #{deconv_block_pallas.1} parent=5 // pred_check
      %p1955 = pneg %p1954
    $region46: #{deconv_block_pallas.1} parent=5 // pred_check_branch
      %1957 = sbr.rel (%p1955) target = $region48
    $region47: #{deconv_block_pallas.1} parent=5 // pred_region
      %s1958 = ssub.s32 %s12, 2
      // Predicated region
      $region49: #{deconv_block_pallas.1} parent=47 // pred_check
        %p1959 = pneg %p151
      $region50: #{deconv_block_pallas.1} parent=47 // pred_check_branch
        %1961 = sbr.rel (%p1959) target = $region52
      $region51: #{deconv_block_pallas.1} parent=47 // pred_region
        %p1962 = scmp.lt.s32.totalorder %s18, 1
        %s1963 = scalar_select %p1962, %s18, 1
        %s1964 = smul.addr %s1963, 12
        %s1965 = smul.addr %s1964, 8
        %s1966 = scalar_lea.vmem %s5, %s1965
      $region52: #{deconv_block_pallas.1} parent=47 // pred_fallthru
        _
    $region48: #{deconv_block_pallas.1} parent=5 // pred_fallthru
      _
  $region6: #{deconv_block_pallas.1} parent=0 // loop_footer
    %s16 = sadd.s32 1, %s12
  $region7: #{deconv_block_pallas.1} parent=0 // loop_footer_branch
    %11 = sbr.rel target = $region3
  $region8: #{deconv_block_pallas.1} parent=0 // loop_exit
    _

</llo_original>
